<compile_context>
chip_gen: v5e
topology: v5e:2x2
jax: 0.10.0
libtpu: 0.0.40
codegen_flags: <defaults>
</compile_context>

<pallas_src>
import functools
import math

import jax
import jax.numpy as jnp
from jax.experimental import pallas as pl
from jax.experimental.pallas import tpu as pltpu


# ----------------------------- Pallas kernel --------------------------------
def decoder_layer_kernel(
    num_heads,
    x_ref, enc_ref, pad_ref,
    wqkv_s_ref, bqkv_s_ref, wo_s_ref,
    wq_e_ref, wkv_e_ref, bkv_e_ref, wo_e_ref,
    w1_ref, b1_ref, w2_ref,
    vecs_ref,
    y_ref, attn_ref,
):
    H = num_heads
    BT, D = x_ref.shape             # folded rows = B*T
    BS = enc_ref.shape[0]           # folded encoder rows = B*S
    B, T, S = attn_ref.shape
    Dh = D // H
    scale = 1.0 / math.sqrt(float(Dh))
    NEG = jnp.float32(-1e9)

    x = x_ref[...]                  # (B*T, D)  f32
    enc = enc_ref[...]              # (B*S, De) bf16
    pad_add = pad_ref[...]          # (1, B*S)  f32 additive (0 / -1e9)

    vecs = vecs_ref[...]            # (10, D)   packed bias / LayerNorm vectors
    bo_s, bq_e, bo_e, b2 = vecs[0:1], vecs[1:2], vecs[2:3], vecs[3:4]
    g1, be1 = vecs[4:5], vecs[5:6]
    g2, be2 = vecs[6:7], vecs[7:8]
    g3, be3 = vecs[8:9], vecs[9:10]

    def layer_norm(v, g, b):
        mu = jnp.mean(v, axis=-1, keepdims=True)
        var = jnp.mean(jnp.square(v - mu), axis=-1, keepdims=True)
        return (v - mu) * jax.lax.rsqrt(var + 1e-5) * g + b

    def split_heads(t_bf):
        # (rows, H*Dh) bf16 -> (H, rows, Dh): static lane slices stacked on a
        # new leading batch dim (single bf16 cast already done by the caller).
        return jnp.stack([t_bf[:, h * Dh:(h + 1) * Dh] for h in range(H)], axis=0)

    def attention(q2d, k2d, v2d, bias, wo_h_ref, bo, need_attn):
        qh = split_heads((q2d * scale).astype(jnp.bfloat16))     # (H, Rq, Dh)
        kh = split_heads(k2d.astype(jnp.bfloat16))               # (H, Rk, Dh)
        vh = split_heads(v2d.astype(jnp.bfloat16))               # (H, Rk, Dh)
        # batched scores / softmax / context; H is the leading batch dim
        s = jnp.einsum('hqd,hkd->hqk', qh, kh,
                       preferred_element_type=jnp.float32)        # (H, Rq, Rk)
        s = s + bias                                              # additive mask
        m = jnp.max(s, axis=-1, keepdims=True)
        e = jnp.exp(s - m)
        p = e * pl.reciprocal(jnp.sum(e, axis=-1, keepdims=True), approx=True)
        ctx = jnp.einsum('hqk,hkd->hqd', p.astype(jnp.bfloat16), vh,
                         preferred_element_type=jnp.float32)      # (H, Rq, Dh)
        # out-projection with a per-head weight (H, Dh, D): batched matmul then
        # sum over heads (no lane concatenate of ctx heads).
        o = jnp.einsum('hqd,hdo->hqo', ctx.astype(jnp.bfloat16), wo_h_ref[...],
                       preferred_element_type=jnp.float32)        # (H, Rq, D)
        out = jnp.sum(o, axis=0) + bo                             # (Rq, D)
        p_avg = jnp.mean(p, axis=0) if need_attn else None        # (Rq, Rk)
        return out, p_avg

    # ---- additive masks (block-diagonal across the folded batch) ----
    rs = jax.lax.broadcasted_iota(jnp.int32, (BT, BT), 0)
    cs = jax.lax.broadcasted_iota(jnp.int32, (BT, BT), 1)
    causal = cs <= rs                    # same row/col offset per batch block
    self_bias = jnp.full((BT, BT), NEG)
    for b in range(B):                   # tiny static loop; avoids integer div
        blk = ((rs >= b * T) & (rs < (b + 1) * T) &
               (cs >= b * T) & (cs < (b + 1) * T))
        self_bias = jnp.where(blk & causal, 0.0, self_bias)

    re_ = jax.lax.broadcasted_iota(jnp.int32, (BT, BS), 0)
    ce_ = jax.lax.broadcasted_iota(jnp.int32, (BT, BS), 1)
    enc_bias = jnp.full((BT, BS), NEG)
    for b in range(B):
        blk = ((re_ >= b * T) & (re_ < (b + 1) * T) &
               (ce_ >= b * S) & (ce_ < (b + 1) * S))
        enc_bias = jnp.where(blk, 0.0, enc_bias)
    enc_bias = enc_bias + pad_add        # encoder key padding, broadcasts rows

    # ---- self-attention block (post-norm) ----
    residual = x
    qkv = jnp.dot(x.astype(jnp.bfloat16), wqkv_s_ref[...],
                  preferred_element_type=jnp.float32) + bqkv_s_ref[...]   # (BT,3D)
    sa, _ = attention(qkv[:, :D], qkv[:, D:2 * D], qkv[:, 2 * D:],
                      self_bias, wo_s_ref, bo_s, need_attn=False)
    x1 = layer_norm(residual + sa, g1, be1)

    # ---- encoder-decoder attention block ----
    residual = x1
    qe = jnp.dot(x1.astype(jnp.bfloat16), wq_e_ref[...],
                 preferred_element_type=jnp.float32) + bq_e               # (BT, D)
    kv = jnp.dot(enc, wkv_e_ref[...],
                 preferred_element_type=jnp.float32) + bkv_e_ref[...]     # (BS,2D)
    ea, p_avg = attention(qe, kv[:, :D], kv[:, D:],
                          enc_bias, wo_e_ref, bo_e, need_attn=True)
    x2 = layer_norm(residual + ea, g2, be2)

    # ---- feed-forward block (ReLU, args.gelu=False) ----
    residual = x2
    hh = jnp.maximum(
        jnp.dot(x2.astype(jnp.bfloat16), w1_ref[...],
                preferred_element_type=jnp.float32) + b1_ref[...], 0.0)
    ff = jnp.dot(hh.astype(jnp.bfloat16), w2_ref[...],
                 preferred_element_type=jnp.float32) + b2
    x3 = layer_norm(residual + ff, g3, be3)

    # ---- fused stores ----
    y_ref[...] = x3                                                # (B*T, D)
    # head-averaged enc-dec attention: per-batch diagonal blocks of the folded
    # (B*T, B*S) map, written as one (B, T, S) slab.
    attn_ref[...] = jnp.stack(
        [p_avg[b * T:(b + 1) * T, b * S:(b + 1) * S] for b in range(B)], axis=0)


# ------------------------------- wrapper -------------------------------------
def transformer_decoder_layer(x_tbd, enc_sbd, enc_pad_mask, params, num_heads):
    """x_tbd: (T, B, D); enc_sbd: (S, B, De); enc_pad_mask: (B, S), 1 = padded.
    Returns (x_out (T, B, D) f32, attn (B, T, S) f32)."""
    T, B, D = x_tbd.shape
    S, _, De = enc_sbd.shape
    H = num_heads
    Dh = D // H

    # Fold batch into the row dim (single kernel invocation). x stays f32 for
    # the residual / LayerNorm path; encoder activations ship as bf16
    # (matmul-only inputs -> half the DMA bytes).
    x = jnp.transpose(x_tbd, (1, 0, 2)).reshape(B * T, D).astype(jnp.float32)
    enc = jnp.transpose(enc_sbd, (1, 0, 2)).reshape(B * S, De).astype(jnp.bfloat16)
    pad_add = (enc_pad_mask.astype(jnp.float32) * jnp.float32(-1e9)).reshape(1, B * S)

    p = params
    bf = lambda w: w.astype(jnp.bfloat16)
    # fused projection weights / packed biases (built once, host side)
    wqkv_s = bf(jnp.concatenate([p["wq_s"], p["wk_s"], p["wv_s"]], axis=1))  # (D,3D)
    bqkv_s = jnp.concatenate([p["bq_s"], p["bk_s"], p["bv_s"]], axis=1)      # (1,3D)
    wo_s_h = bf(p["wo_s"]).reshape(H, Dh, D)                                 # per-head
    wq_e = bf(p["wq_e"])                                                     # (D, D)
    wkv_e = bf(jnp.concatenate([p["wk_e"], p["wv_e"]], axis=1))              # (De,2D)
    bkv_e = jnp.concatenate([p["bk_e"], p["bv_e"]], axis=1)                  # (1,2D)
    wo_e_h = bf(p["wo_e"]).reshape(H, Dh, D)
    w1, b1, w2 = bf(p["w1"]), p["b1"], bf(p["w2"])
    vecs = jnp.concatenate(
        [p["bo_s"], p["bq_e"], p["bo_e"], p["b2"],
         p["g1"], p["be1"], p["g2"], p["be2"], p["g3"], p["be3"]], axis=0)   # (10,D)

    inputs = [x, enc, pad_add,
              wqkv_s, bqkv_s, wo_s_h,
              wq_e, wkv_e, bkv_e, wo_e_h,
              w1, b1, w2, vecs]

    def full_spec(a):
        nd = a.ndim
        return pl.BlockSpec(a.shape, lambda i, _n=nd: (0,) * _n)

    out_shape = (jax.ShapeDtypeStruct((B * T, D), jnp.float32),
                 jax.ShapeDtypeStruct((B, T, S), jnp.float32))
    out_specs = (pl.BlockSpec((B * T, D), lambda i: (0, 0)),
                 pl.BlockSpec((B, T, S), lambda i: (0, 0, 0)))

    kernel = functools.partial(decoder_layer_kernel, H)
    y2d, attn = pl.pallas_call(
        kernel,
        out_shape=out_shape,
        grid=(1,),
        in_specs=[full_spec(a) for a in inputs],
        out_specs=out_specs,
        compiler_params=pltpu.CompilerParams(dimension_semantics=("arbitrary",)),
    )(*inputs)

    y = jnp.transpose(y2d.reshape(B, T, D), (1, 0, 2))
    return y, attn


# --------------------------- parameter construction --------------------------
def xavier_uniform(key, shape):
    fan_in, fan_out = shape[0], shape[1]
    limit = math.sqrt(6.0 / (fan_in + fan_out))
    return jax.random.uniform(key, shape, jnp.float32, -limit, limit)


def make_params(key, D, De, H, F):
    ks = jax.random.split(key, 10)
    p = {}
    # self-attention projections (head-major column grouping)
    p["wq_s"] = xavier_uniform(ks[0], (D, D)); p["bq_s"] = jnp.zeros((1, D), jnp.float32)
    p["wk_s"] = xavier_uniform(ks[1], (D, D)); p["bk_s"] = jnp.zeros((1, D), jnp.float32)
    p["wv_s"] = xavier_uniform(ks[2], (D, D)); p["bv_s"] = jnp.zeros((1, D), jnp.float32)
    p["wo_s"] = xavier_uniform(ks[3], (D, D)); p["bo_s"] = jnp.zeros((1, D), jnp.float32)
    # encoder-decoder attention (k/v take encoder dim De)
    p["wq_e"] = xavier_uniform(ks[4], (D, D));  p["bq_e"] = jnp.zeros((1, D), jnp.float32)
    p["wk_e"] = xavier_uniform(ks[5], (De, D)); p["bk_e"] = jnp.zeros((1, D), jnp.float32)
    p["wv_e"] = xavier_uniform(ks[6], (De, D)); p["bv_e"] = jnp.zeros((1, D), jnp.float32)
    p["wo_e"] = xavier_uniform(ks[7], (D, D));  p["bo_e"] = jnp.zeros((1, D), jnp.float32)
    # FFN
    p["w1"] = xavier_uniform(ks[8], (D, F)); p["b1"] = jnp.zeros((1, F), jnp.float32)
    p["w2"] = xavier_uniform(ks[9], (F, D)); p["b2"] = jnp.zeros((1, D), jnp.float32)
    # layer norms (self_attn_layer_norm, encoder_attn_layer_norm, final_layer_norm)
    for g, b in (("g1", "be1"), ("g2", "be2"), ("g3", "be3")):
        p[g] = jnp.ones((1, D), jnp.float32)
        p[b] = jnp.zeros((1, D), jnp.float32)
    return p


# ---------------------------------- main --------------------------------------
if __name__ == "__main__":
    # args: decoder_embed_dim=32, decoder_attention_heads=4,
    #       encoder_embed_dim=32, encoder_decoder_attention_heads=4,
    #       decoder_ffn_embed_dim=64, decoder_normalize_before=False, gelu=False,
    #       dropouts inactive (inference).
    T, S, B, D, De, H, F = 8, 12, 2, 32, 32, 4, 64

    key = jax.random.PRNGKey(0)
    k_x, k_enc, k_p = jax.random.split(key, 3)

    x = jax.random.normal(k_x, (T, B, D), jnp.float32)            # (seq, batch, embed)
    encoder_out = jax.random.normal(k_enc, (S, B, De), jnp.float32)

    # encoder padding mask: batch 0 has no padding, batch 1 has last 3 keys padded
    encoder_padding_mask = jnp.zeros((B, S), jnp.float32)
    encoder_padding_mask = encoder_padding_mask.at[1, S - 3:].set(1.0)

    params = make_params(k_p, D, De, H, F)

    # causal self_attn_mask is generated inside the kernel (standard decoder usage)
    y, attn = transformer_decoder_layer(x, encoder_out, encoder_padding_mask,
                                        params, H)
    jax.block_until_ready((y, attn))

    assert y.shape == (T, B, D) and attn.shape == (B, T, S)
    assert bool(jnp.all(jnp.isfinite(y))) and bool(jnp.all(jnp.isfinite(attn)))
    print("KERNEL_OK")
</pallas_src>

<mosaic_0001>
module attributes {stable_mosaic.version = 11 : i64} {
  func.func @decoder_layer_kernel(%arg0: i32, %arg1: memref<16x32xf32, #tpu.memory_space<vmem>>, %arg2: memref<24x32xbf16, #tpu.memory_space<vmem>>, %arg3: memref<1x24xf32, #tpu.memory_space<vmem>>, %arg4: memref<32x96xbf16, #tpu.memory_space<vmem>>, %arg5: memref<1x96xf32, #tpu.memory_space<vmem>>, %arg6: memref<4x8x32xbf16, #tpu.memory_space<vmem>>, %arg7: memref<32x32xbf16, #tpu.memory_space<vmem>>, %arg8: memref<32x64xbf16, #tpu.memory_space<vmem>>, %arg9: memref<1x64xf32, #tpu.memory_space<vmem>>, %arg10: memref<4x8x32xbf16, #tpu.memory_space<vmem>>, %arg11: memref<32x64xbf16, #tpu.memory_space<vmem>>, %arg12: memref<1x64xf32, #tpu.memory_space<vmem>>, %arg13: memref<64x32xbf16, #tpu.memory_space<vmem>>, %arg14: memref<10x32xf32, #tpu.memory_space<vmem>>, %arg15: memref<16x32xf32, #tpu.memory_space<vmem>>, %arg16: memref<2x8x12xf32, #tpu.memory_space<vmem>>) attributes {dimension_semantics = [#tpu.dimension_semantics<arbitrary>], iteration_bounds = array<i64: 1>, scalar_prefetch = 0 : i64, scratch_operands = 0 : i64, tpu.core_type = #tpu.core_type<tc>, window_params = [{pipeline_mode = #tpu.pipeline_mode<synchronous>, transform_indices = @transform_0, window_bounds = array<i64: 16, 32>}, {pipeline_mode = #tpu.pipeline_mode<synchronous>, transform_indices = @transform_1, window_bounds = array<i64: 24, 32>}, {pipeline_mode = #tpu.pipeline_mode<synchronous>, transform_indices = @transform_2, window_bounds = array<i64: 1, 24>}, {pipeline_mode = #tpu.pipeline_mode<synchronous>, transform_indices = @transform_3, window_bounds = array<i64: 32, 96>}, {pipeline_mode = #tpu.pipeline_mode<synchronous>, transform_indices = @transform_4, window_bounds = array<i64: 1, 96>}, {pipeline_mode = #tpu.pipeline_mode<synchronous>, transform_indices = @transform_5, window_bounds = array<i64: 4, 8, 32>}, {pipeline_mode = #tpu.pipeline_mode<synchronous>, transform_indices = @transform_6, window_bounds = array<i64: 32, 32>}, {pipeline_mode = #tpu.pipeline_mode<synchronous>, transform_indices = @transform_7, window_bounds = array<i64: 32, 64>}, {pipeline_mode = #tpu.pipeline_mode<synchronous>, transform_indices = @transform_8, window_bounds = array<i64: 1, 64>}, {pipeline_mode = #tpu.pipeline_mode<synchronous>, transform_indices = @transform_9, window_bounds = array<i64: 4, 8, 32>}, {pipeline_mode = #tpu.pipeline_mode<synchronous>, transform_indices = @transform_10, window_bounds = array<i64: 32, 64>}, {pipeline_mode = #tpu.pipeline_mode<synchronous>, transform_indices = @transform_11, window_bounds = array<i64: 1, 64>}, {pipeline_mode = #tpu.pipeline_mode<synchronous>, transform_indices = @transform_12, window_bounds = array<i64: 64, 32>}, {pipeline_mode = #tpu.pipeline_mode<synchronous>, transform_indices = @transform_13, window_bounds = array<i64: 10, 32>}, {pipeline_mode = #tpu.pipeline_mode<synchronous>, transform_indices = @transform_14, window_bounds = array<i64: 16, 32>}, {pipeline_mode = #tpu.pipeline_mode<synchronous>, transform_indices = @transform_15, window_bounds = array<i64: 2, 8, 12>}]} {
    %c0 = arith.constant 0 : index
    %c0_0 = arith.constant 0 : index
    %0 = vector.load %arg1[%c0, %c0_0] : memref<16x32xf32, #tpu.memory_space<vmem>>, vector<16x32xf32>
    %c0_1 = arith.constant 0 : index
    %c0_2 = arith.constant 0 : index
    %1 = vector.load %arg2[%c0_1, %c0_2] : memref<24x32xbf16, #tpu.memory_space<vmem>>, vector<24x32xbf16>
    %c0_3 = arith.constant 0 : index
    %c0_4 = arith.constant 0 : index
    %2 = vector.load %arg3[%c0_3, %c0_4] : memref<1x24xf32, #tpu.memory_space<vmem>>, vector<1x24xf32>
    %c0_5 = arith.constant 0 : index
    %c0_6 = arith.constant 0 : index
    %3 = vector.load %arg14[%c0_5, %c0_6] : memref<10x32xf32, #tpu.memory_space<vmem>>, vector<10x32xf32>
    %4 = vector.extract_strided_slice %3 {offsets = [0, 0], sizes = [1, 32], strides = [1, 1]} : vector<10x32xf32> to vector<1x32xf32>
    %5 = vector.extract_strided_slice %3 {offsets = [1, 0], sizes = [1, 32], strides = [1, 1]} : vector<10x32xf32> to vector<1x32xf32>
    %6 = vector.extract_strided_slice %3 {offsets = [2, 0], sizes = [1, 32], strides = [1, 1]} : vector<10x32xf32> to vector<1x32xf32>
    %7 = vector.extract_strided_slice %3 {offsets = [3, 0], sizes = [1, 32], strides = [1, 1]} : vector<10x32xf32> to vector<1x32xf32>
    %8 = vector.extract_strided_slice %3 {offsets = [4, 0], sizes = [1, 32], strides = [1, 1]} : vector<10x32xf32> to vector<1x32xf32>
    %9 = vector.extract_strided_slice %3 {offsets = [5, 0], sizes = [1, 32], strides = [1, 1]} : vector<10x32xf32> to vector<1x32xf32>
    %10 = vector.extract_strided_slice %3 {offsets = [6, 0], sizes = [1, 32], strides = [1, 1]} : vector<10x32xf32> to vector<1x32xf32>
    %11 = vector.extract_strided_slice %3 {offsets = [7, 0], sizes = [1, 32], strides = [1, 1]} : vector<10x32xf32> to vector<1x32xf32>
    %12 = vector.extract_strided_slice %3 {offsets = [8, 0], sizes = [1, 32], strides = [1, 1]} : vector<10x32xf32> to vector<1x32xf32>
    %13 = vector.extract_strided_slice %3 {offsets = [9, 0], sizes = [1, 32], strides = [1, 1]} : vector<10x32xf32> to vector<1x32xf32>
    %14 = tpu.iota {dimensions = array<i32: 0>} : vector<16x16xi32>
    %15 = tpu.iota {dimensions = array<i32: 1>} : vector<16x16xi32>
    %16 = arith.cmpi sle, %15, %14 : vector<16x16xi32>
    %cst = arith.constant -1.000000e+09 : f32
    %17 = vector.broadcast %cst : f32 to vector<16x16xf32>
    %c0_i32 = arith.constant 0 : i32
    %18 = vector.broadcast %c0_i32 : i32 to vector<16x16xi32>
    %19 = arith.cmpi sge, %14, %18 : vector<16x16xi32>
    %c8_i32 = arith.constant 8 : i32
    %20 = vector.broadcast %c8_i32 : i32 to vector<16x16xi32>
    %21 = arith.cmpi slt, %14, %20 : vector<16x16xi32>
    %22 = arith.andi %19, %21 : vector<16x16xi1>
    %c0_i32_7 = arith.constant 0 : i32
    %23 = vector.broadcast %c0_i32_7 : i32 to vector<16x16xi32>
    %24 = arith.cmpi sge, %15, %23 : vector<16x16xi32>
    %25 = arith.andi %22, %24 : vector<16x16xi1>
    %c8_i32_8 = arith.constant 8 : i32
    %26 = vector.broadcast %c8_i32_8 : i32 to vector<16x16xi32>
    %27 = arith.cmpi slt, %15, %26 : vector<16x16xi32>
    %28 = arith.andi %25, %27 : vector<16x16xi1>
    %29 = arith.andi %28, %16 : vector<16x16xi1>
    %cst_9 = arith.constant 0.000000e+00 : f32
    %30 = vector.broadcast %cst_9 : f32 to vector<16x16xf32>
    %31 = arith.select %29, %30, %17 : vector<16x16xi1>, vector<16x16xf32>
    %c8_i32_10 = arith.constant 8 : i32
    %32 = vector.broadcast %c8_i32_10 : i32 to vector<16x16xi32>
    %33 = arith.cmpi sge, %14, %32 : vector<16x16xi32>
    %c16_i32 = arith.constant 16 : i32
    %34 = vector.broadcast %c16_i32 : i32 to vector<16x16xi32>
    %35 = arith.cmpi slt, %14, %34 : vector<16x16xi32>
    %36 = arith.andi %33, %35 : vector<16x16xi1>
    %c8_i32_11 = arith.constant 8 : i32
    %37 = vector.broadcast %c8_i32_11 : i32 to vector<16x16xi32>
    %38 = arith.cmpi sge, %15, %37 : vector<16x16xi32>
    %39 = arith.andi %36, %38 : vector<16x16xi1>
    %c16_i32_12 = arith.constant 16 : i32
    %40 = vector.broadcast %c16_i32_12 : i32 to vector<16x16xi32>
    %41 = arith.cmpi slt, %15, %40 : vector<16x16xi32>
    %42 = arith.andi %39, %41 : vector<16x16xi1>
    %43 = arith.andi %42, %16 : vector<16x16xi1>
    %cst_13 = arith.constant 0.000000e+00 : f32
    %44 = vector.broadcast %cst_13 : f32 to vector<16x16xf32>
    %45 = arith.select %43, %44, %31 : vector<16x16xi1>, vector<16x16xf32>
    %46 = tpu.iota {dimensions = array<i32: 0>} : vector<16x24xi32>
    %47 = tpu.iota {dimensions = array<i32: 1>} : vector<16x24xi32>
    %cst_14 = arith.constant -1.000000e+09 : f32
    %48 = vector.broadcast %cst_14 : f32 to vector<16x24xf32>
    %c0_i32_15 = arith.constant 0 : i32
    %49 = vector.broadcast %c0_i32_15 : i32 to vector<16x24xi32>
    %50 = arith.cmpi sge, %46, %49 : vector<16x24xi32>
    %c8_i32_16 = arith.constant 8 : i32
    %51 = vector.broadcast %c8_i32_16 : i32 to vector<16x24xi32>
    %52 = arith.cmpi slt, %46, %51 : vector<16x24xi32>
    %53 = arith.andi %50, %52 : vector<16x24xi1>
    %c0_i32_17 = arith.constant 0 : i32
    %54 = vector.broadcast %c0_i32_17 : i32 to vector<16x24xi32>
    %55 = arith.cmpi sge, %47, %54 : vector<16x24xi32>
    %56 = arith.andi %53, %55 : vector<16x24xi1>
    %c12_i32 = arith.constant 12 : i32
    %57 = vector.broadcast %c12_i32 : i32 to vector<16x24xi32>
    %58 = arith.cmpi slt, %47, %57 : vector<16x24xi32>
    %59 = arith.andi %56, %58 : vector<16x24xi1>
    %cst_18 = arith.constant 0.000000e+00 : f32
    %60 = vector.broadcast %cst_18 : f32 to vector<16x24xf32>
    %61 = arith.select %59, %60, %48 : vector<16x24xi1>, vector<16x24xf32>
    %c8_i32_19 = arith.constant 8 : i32
    %62 = vector.broadcast %c8_i32_19 : i32 to vector<16x24xi32>
    %63 = arith.cmpi sge, %46, %62 : vector<16x24xi32>
    %c16_i32_20 = arith.constant 16 : i32
    %64 = vector.broadcast %c16_i32_20 : i32 to vector<16x24xi32>
    %65 = arith.cmpi slt, %46, %64 : vector<16x24xi32>
    %66 = arith.andi %63, %65 : vector<16x24xi1>
    %c12_i32_21 = arith.constant 12 : i32
    %67 = vector.broadcast %c12_i32_21 : i32 to vector<16x24xi32>
    %68 = arith.cmpi sge, %47, %67 : vector<16x24xi32>
    %69 = arith.andi %66, %68 : vector<16x24xi1>
    %c24_i32 = arith.constant 24 : i32
    %70 = vector.broadcast %c24_i32 : i32 to vector<16x24xi32>
    %71 = arith.cmpi slt, %47, %70 : vector<16x24xi32>
    %72 = arith.andi %69, %71 : vector<16x24xi1>
    %cst_22 = arith.constant 0.000000e+00 : f32
    %73 = vector.broadcast %cst_22 : f32 to vector<16x24xf32>
    %74 = arith.select %72, %73, %61 : vector<16x24xi1>, vector<16x24xf32>
    %75 = vector.broadcast %2 : vector<1x24xf32> to vector<16x24xf32>
    %76 = arith.addf %74, %75 : vector<16x24xf32>
    %77 = arith.truncf %0 : vector<16x32xf32> to vector<16x32xbf16>
    %c0_23 = arith.constant 0 : index
    %c0_24 = arith.constant 0 : index
    %78 = vector.load %arg4[%c0_23, %c0_24] : memref<32x96xbf16, #tpu.memory_space<vmem>>, vector<32x96xbf16>
    %cst_25 = arith.constant dense<0.000000e+00> : vector<16x96xf32>
    %79 = tpu.matmul %77, %78, %cst_25 {dimension_numbers = #tpu.dot_dimension_numbers<[1], [0], [0], [1], [0, 0, 1, 1], [], []>} : vector<16x32xbf16>, vector<32x96xbf16>, vector<16x96xf32> -> vector<16x96xf32>
    %c0_26 = arith.constant 0 : index
    %c0_27 = arith.constant 0 : index
    %80 = vector.load %arg5[%c0_26, %c0_27] : memref<1x96xf32, #tpu.memory_space<vmem>>, vector<1x96xf32>
    %81 = vector.broadcast %80 : vector<1x96xf32> to vector<16x96xf32>
    %82 = arith.addf %79, %81 : vector<16x96xf32>
    %83 = vector.extract_strided_slice %82 {offsets = [0, 0], sizes = [16, 32], strides = [1, 1]} : vector<16x96xf32> to vector<16x32xf32>
    %84 = vector.extract_strided_slice %82 {offsets = [0, 32], sizes = [16, 32], strides = [1, 1]} : vector<16x96xf32> to vector<16x32xf32>
    %85 = vector.extract_strided_slice %82 {offsets = [0, 64], sizes = [16, 32], strides = [1, 1]} : vector<16x96xf32> to vector<16x32xf32>
    %cst_28 = arith.constant 0.353553385 : f32
    %86 = vector.broadcast %cst_28 : f32 to vector<16x32xf32>
    %87 = arith.mulf %83, %86 : vector<16x32xf32>
    %88 = arith.truncf %87 : vector<16x32xf32> to vector<16x32xbf16>
    %89 = vector.extract_strided_slice %88 {offsets = [0, 0], sizes = [16, 8], strides = [1, 1]} : vector<16x32xbf16> to vector<16x8xbf16>
    %90 = vector.extract_strided_slice %88 {offsets = [0, 8], sizes = [16, 8], strides = [1, 1]} : vector<16x32xbf16> to vector<16x8xbf16>
    %91 = vector.extract_strided_slice %88 {offsets = [0, 16], sizes = [16, 8], strides = [1, 1]} : vector<16x32xbf16> to vector<16x8xbf16>
    %92 = vector.extract_strided_slice %88 {offsets = [0, 24], sizes = [16, 8], strides = [1, 1]} : vector<16x32xbf16> to vector<16x8xbf16>
    %93 = vector.shape_cast %89 : vector<16x8xbf16> to vector<1x16x8xbf16>
    %94 = vector.shape_cast %90 : vector<16x8xbf16> to vector<1x16x8xbf16>
    %95 = vector.shape_cast %91 : vector<16x8xbf16> to vector<1x16x8xbf16>
    %96 = vector.shape_cast %92 : vector<16x8xbf16> to vector<1x16x8xbf16>
    %97 = tpu.concatenate %93, %94, %95, %96 in 0 : vector<1x16x8xbf16>, vector<1x16x8xbf16>, vector<1x16x8xbf16>, vector<1x16x8xbf16> -> vector<4x16x8xbf16>
    %98 = arith.truncf %84 : vector<16x32xf32> to vector<16x32xbf16>
    %99 = vector.extract_strided_slice %98 {offsets = [0, 0], sizes = [16, 8], strides = [1, 1]} : vector<16x32xbf16> to vector<16x8xbf16>
    %100 = vector.extract_strided_slice %98 {offsets = [0, 8], sizes = [16, 8], strides = [1, 1]} : vector<16x32xbf16> to vector<16x8xbf16>
    %101 = vector.extract_strided_slice %98 {offsets = [0, 16], sizes = [16, 8], strides = [1, 1]} : vector<16x32xbf16> to vector<16x8xbf16>
    %102 = vector.extract_strided_slice %98 {offsets = [0, 24], sizes = [16, 8], strides = [1, 1]} : vector<16x32xbf16> to vector<16x8xbf16>
    %103 = vector.shape_cast %99 : vector<16x8xbf16> to vector<1x16x8xbf16>
    %104 = vector.shape_cast %100 : vector<16x8xbf16> to vector<1x16x8xbf16>
    %105 = vector.shape_cast %101 : vector<16x8xbf16> to vector<1x16x8xbf16>
    %106 = vector.shape_cast %102 : vector<16x8xbf16> to vector<1x16x8xbf16>
    %107 = tpu.concatenate %103, %104, %105, %106 in 0 : vector<1x16x8xbf16>, vector<1x16x8xbf16>, vector<1x16x8xbf16>, vector<1x16x8xbf16> -> vector<4x16x8xbf16>
    %108 = arith.truncf %85 : vector<16x32xf32> to vector<16x32xbf16>
    %109 = vector.extract_strided_slice %108 {offsets = [0, 0], sizes = [16, 8], strides = [1, 1]} : vector<16x32xbf16> to vector<16x8xbf16>
    %110 = vector.extract_strided_slice %108 {offsets = [0, 8], sizes = [16, 8], strides = [1, 1]} : vector<16x32xbf16> to vector<16x8xbf16>
    %111 = vector.extract_strided_slice %108 {offsets = [0, 16], sizes = [16, 8], strides = [1, 1]} : vector<16x32xbf16> to vector<16x8xbf16>
    %112 = vector.extract_strided_slice %108 {offsets = [0, 24], sizes = [16, 8], strides = [1, 1]} : vector<16x32xbf16> to vector<16x8xbf16>
    %113 = vector.shape_cast %109 : vector<16x8xbf16> to vector<1x16x8xbf16>
    %114 = vector.shape_cast %110 : vector<16x8xbf16> to vector<1x16x8xbf16>
    %115 = vector.shape_cast %111 : vector<16x8xbf16> to vector<1x16x8xbf16>
    %116 = vector.shape_cast %112 : vector<16x8xbf16> to vector<1x16x8xbf16>
    %117 = tpu.concatenate %113, %114, %115, %116 in 0 : vector<1x16x8xbf16>, vector<1x16x8xbf16>, vector<1x16x8xbf16>, vector<1x16x8xbf16> -> vector<4x16x8xbf16>
    "tpu.trace_start"() <{level = 10 : i32, message = "hqd,hkd->hqk"}> : () -> ()
    %cst_29 = arith.constant dense<0.000000e+00> : vector<4x16x16xf32>
    %118 = tpu.matmul %97, %107, %cst_29 {dimension_numbers = #tpu.dot_dimension_numbers<[2], [2], [1], [1], [0, 0, 0, 1, 1, 1], [0], [0]>} : vector<4x16x8xbf16>, vector<4x16x8xbf16>, vector<4x16x16xf32> -> vector<4x16x16xf32>
    "tpu.trace_stop"() : () -> ()
    %119 = vector.shape_cast %45 : vector<16x16xf32> to vector<1x16x16xf32>
    %120 = vector.broadcast %119 : vector<1x16x16xf32> to vector<4x16x16xf32>
    %121 = arith.addf %118, %120 : vector<4x16x16xf32>
    %cst_30 = arith.constant dense<0xFF800000> : vector<4x16xf32>
    %122 = vector.multi_reduction <maximumf>, %121, %cst_30 [2] : vector<4x16x16xf32> to vector<4x16xf32>
    %123 = vector.shape_cast %122 : vector<4x16xf32> to vector<4x16x1xf32>
    %124 = vector.broadcast %123 : vector<4x16x1xf32> to vector<4x16x16xf32>
    %125 = arith.subf %121, %124 : vector<4x16x16xf32>
    %126 = math.exp %125 : vector<4x16x16xf32>
    %cst_31 = arith.constant dense<0.000000e+00> : vector<4x16xf32>
    %127 = vector.multi_reduction <add>, %126, %cst_31 [2] : vector<4x16x16xf32> to vector<4x16xf32>
    %128 = vector.shape_cast %127 : vector<4x16xf32> to vector<4x16x1xf32>
    %129 = tpu.reciprocal %128 {approx = true} : vector<4x16x1xf32> -> vector<4x16x1xf32>
    %130 = vector.broadcast %129 : vector<4x16x1xf32> to vector<4x16x16xf32>
    %131 = arith.mulf %126, %130 : vector<4x16x16xf32>
    %132 = arith.truncf %131 : vector<4x16x16xf32> to vector<4x16x16xbf16>
    "tpu.trace_start"() <{level = 10 : i32, message = "hqk,hkd->hqd"}> : () -> ()
    %cst_32 = arith.constant dense<0.000000e+00> : vector<4x16x8xf32>
    %133 = tpu.matmul %132, %117, %cst_32 {dimension_numbers = #tpu.dot_dimension_numbers<[2], [1], [1], [2], [0, 0, 0, 1, 1, 2], [0], [0]>} : vector<4x16x16xbf16>, vector<4x16x8xbf16>, vector<4x16x8xf32> -> vector<4x16x8xf32>
    "tpu.trace_stop"() : () -> ()
    %134 = arith.truncf %133 : vector<4x16x8xf32> to vector<4x16x8xbf16>
    %c0_33 = arith.constant 0 : index
    %c0_34 = arith.constant 0 : index
    %c0_35 = arith.constant 0 : index
    %135 = vector.load %arg6[%c0_33, %c0_34, %c0_35] : memref<4x8x32xbf16, #tpu.memory_space<vmem>>, vector<4x8x32xbf16>
    "tpu.trace_start"() <{level = 10 : i32, message = "hqd,hdo->hqo"}> : () -> ()
    %cst_36 = arith.constant dense<0.000000e+00> : vector<4x16x32xf32>
    %136 = tpu.matmul %134, %135, %cst_36 {dimension_numbers = #tpu.dot_dimension_numbers<[2], [1], [1], [2], [0, 0, 0, 1, 1, 2], [0], [0]>} : vector<4x16x8xbf16>, vector<4x8x32xbf16>, vector<4x16x32xf32> -> vector<4x16x32xf32>
    "tpu.trace_stop"() : () -> ()
    %cst_37 = arith.constant dense<0.000000e+00> : vector<16x32xf32>
    %137 = vector.multi_reduction <add>, %136, %cst_37 [0] : vector<4x16x32xf32> to vector<16x32xf32>
    %138 = vector.broadcast %4 : vector<1x32xf32> to vector<16x32xf32>
    %139 = arith.addf %137, %138 : vector<16x32xf32>
    %140 = arith.addf %0, %139 : vector<16x32xf32>
    %cst_38 = arith.constant dense<0.000000e+00> : vector<16xf32>
    %141 = vector.multi_reduction <add>, %140, %cst_38 [1] : vector<16x32xf32> to vector<16xf32>
    %142 = vector.shape_cast %141 : vector<16xf32> to vector<16x1xf32>
    %cst_39 = arith.constant 3.200000e+01 : f32
    %143 = vector.broadcast %cst_39 : f32 to vector<16x1xf32>
    %144 = arith.divf %142, %143 : vector<16x1xf32>
    %145 = vector.broadcast %144 : vector<16x1xf32> to vector<16x32xf32>
    %146 = arith.subf %140, %145 : vector<16x32xf32>
    %147 = arith.mulf %146, %146 : vector<16x32xf32>
    %cst_40 = arith.constant dense<0.000000e+00> : vector<16xf32>
    %148 = vector.multi_reduction <add>, %147, %cst_40 [1] : vector<16x32xf32> to vector<16xf32>
    %149 = vector.shape_cast %148 : vector<16xf32> to vector<16x1xf32>
    %cst_41 = arith.constant 3.200000e+01 : f32
    %150 = vector.broadcast %cst_41 : f32 to vector<16x1xf32>
    %151 = arith.divf %149, %150 : vector<16x1xf32>
    %152 = vector.broadcast %144 : vector<16x1xf32> to vector<16x32xf32>
    %153 = arith.subf %140, %152 : vector<16x32xf32>
    %cst_42 = arith.constant 9.99999974E-6 : f32
    %154 = vector.broadcast %cst_42 : f32 to vector<16x1xf32>
    %155 = arith.addf %151, %154 : vector<16x1xf32>
    %156 = math.rsqrt %155 : vector<16x1xf32>
    %157 = vector.broadcast %156 : vector<16x1xf32> to vector<16x32xf32>
    %158 = arith.mulf %153, %157 : vector<16x32xf32>
    %159 = vector.broadcast %8 : vector<1x32xf32> to vector<16x32xf32>
    %160 = arith.mulf %158, %159 : vector<16x32xf32>
    %161 = vector.broadcast %9 : vector<1x32xf32> to vector<16x32xf32>
    %162 = arith.addf %160, %161 : vector<16x32xf32>
    %163 = arith.truncf %162 : vector<16x32xf32> to vector<16x32xbf16>
    %c0_43 = arith.constant 0 : index
    %c0_44 = arith.constant 0 : index
    %164 = vector.load %arg7[%c0_43, %c0_44] : memref<32x32xbf16, #tpu.memory_space<vmem>>, vector<32x32xbf16>
    %cst_45 = arith.constant dense<0.000000e+00> : vector<16x32xf32>
    %165 = tpu.matmul %163, %164, %cst_45 {dimension_numbers = #tpu.dot_dimension_numbers<[1], [0], [0], [1], [0, 0, 1, 1], [], []>} : vector<16x32xbf16>, vector<32x32xbf16>, vector<16x32xf32> -> vector<16x32xf32>
    %166 = vector.broadcast %5 : vector<1x32xf32> to vector<16x32xf32>
    %167 = arith.addf %165, %166 : vector<16x32xf32>
    %c0_46 = arith.constant 0 : index
    %c0_47 = arith.constant 0 : index
    %168 = vector.load %arg8[%c0_46, %c0_47] : memref<32x64xbf16, #tpu.memory_space<vmem>>, vector<32x64xbf16>
    %cst_48 = arith.constant dense<0.000000e+00> : vector<24x64xf32>
    %169 = tpu.matmul %1, %168, %cst_48 {dimension_numbers = #tpu.dot_dimension_numbers<[1], [0], [0], [1], [0, 0, 1, 1], [], []>} : vector<24x32xbf16>, vector<32x64xbf16>, vector<24x64xf32> -> vector<24x64xf32>
    %c0_49 = arith.constant 0 : index
    %c0_50 = arith.constant 0 : index
    %170 = vector.load %arg9[%c0_49, %c0_50] : memref<1x64xf32, #tpu.memory_space<vmem>>, vector<1x64xf32>
    %171 = vector.broadcast %170 : vector<1x64xf32> to vector<24x64xf32>
    %172 = arith.addf %169, %171 : vector<24x64xf32>
    %173 = vector.extract_strided_slice %172 {offsets = [0, 0], sizes = [24, 32], strides = [1, 1]} : vector<24x64xf32> to vector<24x32xf32>
    %174 = vector.extract_strided_slice %172 {offsets = [0, 32], sizes = [24, 32], strides = [1, 1]} : vector<24x64xf32> to vector<24x32xf32>
    %cst_51 = arith.constant 0.353553385 : f32
    %175 = vector.broadcast %cst_51 : f32 to vector<16x32xf32>
    %176 = arith.mulf %167, %175 : vector<16x32xf32>
    %177 = arith.truncf %176 : vector<16x32xf32> to vector<16x32xbf16>
    %178 = vector.extract_strided_slice %177 {offsets = [0, 0], sizes = [16, 8], strides = [1, 1]} : vector<16x32xbf16> to vector<16x8xbf16>
    %179 = vector.extract_strided_slice %177 {offsets = [0, 8], sizes = [16, 8], strides = [1, 1]} : vector<16x32xbf16> to vector<16x8xbf16>
    %180 = vector.extract_strided_slice %177 {offsets = [0, 16], sizes = [16, 8], strides = [1, 1]} : vector<16x32xbf16> to vector<16x8xbf16>
    %181 = vector.extract_strided_slice %177 {offsets = [0, 24], sizes = [16, 8], strides = [1, 1]} : vector<16x32xbf16> to vector<16x8xbf16>
    %182 = vector.shape_cast %178 : vector<16x8xbf16> to vector<1x16x8xbf16>
    %183 = vector.shape_cast %179 : vector<16x8xbf16> to vector<1x16x8xbf16>
    %184 = vector.shape_cast %180 : vector<16x8xbf16> to vector<1x16x8xbf16>
    %185 = vector.shape_cast %181 : vector<16x8xbf16> to vector<1x16x8xbf16>
    %186 = tpu.concatenate %182, %183, %184, %185 in 0 : vector<1x16x8xbf16>, vector<1x16x8xbf16>, vector<1x16x8xbf16>, vector<1x16x8xbf16> -> vector<4x16x8xbf16>
    %187 = arith.truncf %173 : vector<24x32xf32> to vector<24x32xbf16>
    %188 = vector.extract_strided_slice %187 {offsets = [0, 0], sizes = [24, 8], strides = [1, 1]} : vector<24x32xbf16> to vector<24x8xbf16>
    %189 = vector.extract_strided_slice %187 {offsets = [0, 8], sizes = [24, 8], strides = [1, 1]} : vector<24x32xbf16> to vector<24x8xbf16>
    %190 = vector.extract_strided_slice %187 {offsets = [0, 16], sizes = [24, 8], strides = [1, 1]} : vector<24x32xbf16> to vector<24x8xbf16>
    %191 = vector.extract_strided_slice %187 {offsets = [0, 24], sizes = [24, 8], strides = [1, 1]} : vector<24x32xbf16> to vector<24x8xbf16>
    %192 = vector.shape_cast %188 : vector<24x8xbf16> to vector<1x24x8xbf16>
    %193 = vector.shape_cast %189 : vector<24x8xbf16> to vector<1x24x8xbf16>
    %194 = vector.shape_cast %190 : vector<24x8xbf16> to vector<1x24x8xbf16>
    %195 = vector.shape_cast %191 : vector<24x8xbf16> to vector<1x24x8xbf16>
    %196 = tpu.concatenate %192, %193, %194, %195 in 0 : vector<1x24x8xbf16>, vector<1x24x8xbf16>, vector<1x24x8xbf16>, vector<1x24x8xbf16> -> vector<4x24x8xbf16>
    %197 = arith.truncf %174 : vector<24x32xf32> to vector<24x32xbf16>
    %198 = vector.extract_strided_slice %197 {offsets = [0, 0], sizes = [24, 8], strides = [1, 1]} : vector<24x32xbf16> to vector<24x8xbf16>
    %199 = vector.extract_strided_slice %197 {offsets = [0, 8], sizes = [24, 8], strides = [1, 1]} : vector<24x32xbf16> to vector<24x8xbf16>
    %200 = vector.extract_strided_slice %197 {offsets = [0, 16], sizes = [24, 8], strides = [1, 1]} : vector<24x32xbf16> to vector<24x8xbf16>
    %201 = vector.extract_strided_slice %197 {offsets = [0, 24], sizes = [24, 8], strides = [1, 1]} : vector<24x32xbf16> to vector<24x8xbf16>
    %202 = vector.shape_cast %198 : vector<24x8xbf16> to vector<1x24x8xbf16>
    %203 = vector.shape_cast %199 : vector<24x8xbf16> to vector<1x24x8xbf16>
    %204 = vector.shape_cast %200 : vector<24x8xbf16> to vector<1x24x8xbf16>
    %205 = vector.shape_cast %201 : vector<24x8xbf16> to vector<1x24x8xbf16>
    %206 = tpu.concatenate %202, %203, %204, %205 in 0 : vector<1x24x8xbf16>, vector<1x24x8xbf16>, vector<1x24x8xbf16>, vector<1x24x8xbf16> -> vector<4x24x8xbf16>
    "tpu.trace_start"() <{level = 10 : i32, message = "hqd,hkd->hqk"}> : () -> ()
    %cst_52 = arith.constant dense<0.000000e+00> : vector<4x16x24xf32>
    %207 = tpu.matmul %186, %196, %cst_52 {dimension_numbers = #tpu.dot_dimension_numbers<[2], [2], [1], [1], [0, 0, 0, 1, 1, 1], [0], [0]>} : vector<4x16x8xbf16>, vector<4x24x8xbf16>, vector<4x16x24xf32> -> vector<4x16x24xf32>
    "tpu.trace_stop"() : () -> ()
    %208 = vector.shape_cast %76 : vector<16x24xf32> to vector<1x16x24xf32>
    %209 = vector.broadcast %208 : vector<1x16x24xf32> to vector<4x16x24xf32>
    %210 = arith.addf %207, %209 : vector<4x16x24xf32>
    %cst_53 = arith.constant dense<0xFF800000> : vector<4x16xf32>
    %211 = vector.multi_reduction <maximumf>, %210, %cst_53 [2] : vector<4x16x24xf32> to vector<4x16xf32>
    %212 = vector.shape_cast %211 : vector<4x16xf32> to vector<4x16x1xf32>
    %213 = vector.broadcast %212 : vector<4x16x1xf32> to vector<4x16x24xf32>
    %214 = arith.subf %210, %213 : vector<4x16x24xf32>
    %215 = math.exp %214 : vector<4x16x24xf32>
    %cst_54 = arith.constant dense<0.000000e+00> : vector<4x16xf32>
    %216 = vector.multi_reduction <add>, %215, %cst_54 [2] : vector<4x16x24xf32> to vector<4x16xf32>
    %217 = vector.shape_cast %216 : vector<4x16xf32> to vector<4x16x1xf32>
    %218 = tpu.reciprocal %217 {approx = true} : vector<4x16x1xf32> -> vector<4x16x1xf32>
    %219 = vector.broadcast %218 : vector<4x16x1xf32> to vector<4x16x24xf32>
    %220 = arith.mulf %215, %219 : vector<4x16x24xf32>
    %221 = arith.truncf %220 : vector<4x16x24xf32> to vector<4x16x24xbf16>
    "tpu.trace_start"() <{level = 10 : i32, message = "hqk,hkd->hqd"}> : () -> ()
    %cst_55 = arith.constant dense<0.000000e+00> : vector<4x16x8xf32>
    %222 = tpu.matmul %221, %206, %cst_55 {dimension_numbers = #tpu.dot_dimension_numbers<[2], [1], [1], [2], [0, 0, 0, 1, 1, 2], [0], [0]>} : vector<4x16x24xbf16>, vector<4x24x8xbf16>, vector<4x16x8xf32> -> vector<4x16x8xf32>
    "tpu.trace_stop"() : () -> ()
    %223 = arith.truncf %222 : vector<4x16x8xf32> to vector<4x16x8xbf16>
    %c0_56 = arith.constant 0 : index
    %c0_57 = arith.constant 0 : index
    %c0_58 = arith.constant 0 : index
    %224 = vector.load %arg10[%c0_56, %c0_57, %c0_58] : memref<4x8x32xbf16, #tpu.memory_space<vmem>>, vector<4x8x32xbf16>
    "tpu.trace_start"() <{level = 10 : i32, message = "hqd,hdo->hqo"}> : () -> ()
    %cst_59 = arith.constant dense<0.000000e+00> : vector<4x16x32xf32>
    %225 = tpu.matmul %223, %224, %cst_59 {dimension_numbers = #tpu.dot_dimension_numbers<[2], [1], [1], [2], [0, 0, 0, 1, 1, 2], [0], [0]>} : vector<4x16x8xbf16>, vector<4x8x32xbf16>, vector<4x16x32xf32> -> vector<4x16x32xf32>
    "tpu.trace_stop"() : () -> ()
    %cst_60 = arith.constant dense<0.000000e+00> : vector<16x32xf32>
    %226 = vector.multi_reduction <add>, %225, %cst_60 [0] : vector<4x16x32xf32> to vector<16x32xf32>
    %227 = vector.broadcast %6 : vector<1x32xf32> to vector<16x32xf32>
    %228 = arith.addf %226, %227 : vector<16x32xf32>
    %cst_61 = arith.constant dense<0.000000e+00> : vector<16x24xf32>
    %229 = vector.multi_reduction <add>, %220, %cst_61 [0] : vector<4x16x24xf32> to vector<16x24xf32>
    %cst_62 = arith.constant 4.000000e+00 : f32
    %230 = vector.broadcast %cst_62 : f32 to vector<16x24xf32>
    %231 = arith.divf %229, %230 : vector<16x24xf32>
    %232 = arith.addf %162, %228 : vector<16x32xf32>
    %cst_63 = arith.constant dense<0.000000e+00> : vector<16xf32>
    %233 = vector.multi_reduction <add>, %232, %cst_63 [1] : vector<16x32xf32> to vector<16xf32>
    %234 = vector.shape_cast %233 : vector<16xf32> to vector<16x1xf32>
    %cst_64 = arith.constant 3.200000e+01 : f32
    %235 = vector.broadcast %cst_64 : f32 to vector<16x1xf32>
    %236 = arith.divf %234, %235 : vector<16x1xf32>
    %237 = vector.broadcast %236 : vector<16x1xf32> to vector<16x32xf32>
    %238 = arith.subf %232, %237 : vector<16x32xf32>
    %239 = arith.mulf %238, %238 : vector<16x32xf32>
    %cst_65 = arith.constant dense<0.000000e+00> : vector<16xf32>
    %240 = vector.multi_reduction <add>, %239, %cst_65 [1] : vector<16x32xf32> to vector<16xf32>
    %241 = vector.shape_cast %240 : vector<16xf32> to vector<16x1xf32>
    %cst_66 = arith.constant 3.200000e+01 : f32
    %242 = vector.broadcast %cst_66 : f32 to vector<16x1xf32>
    %243 = arith.divf %241, %242 : vector<16x1xf32>
    %244 = vector.broadcast %236 : vector<16x1xf32> to vector<16x32xf32>
    %245 = arith.subf %232, %244 : vector<16x32xf32>
    %cst_67 = arith.constant 9.99999974E-6 : f32
    %246 = vector.broadcast %cst_67 : f32 to vector<16x1xf32>
    %247 = arith.addf %243, %246 : vector<16x1xf32>
    %248 = math.rsqrt %247 : vector<16x1xf32>
    %249 = vector.broadcast %248 : vector<16x1xf32> to vector<16x32xf32>
    %250 = arith.mulf %245, %249 : vector<16x32xf32>
    %251 = vector.broadcast %10 : vector<1x32xf32> to vector<16x32xf32>
    %252 = arith.mulf %250, %251 : vector<16x32xf32>
    %253 = vector.broadcast %11 : vector<1x32xf32> to vector<16x32xf32>
    %254 = arith.addf %252, %253 : vector<16x32xf32>
    %255 = arith.truncf %254 : vector<16x32xf32> to vector<16x32xbf16>
    %c0_68 = arith.constant 0 : index
    %c0_69 = arith.constant 0 : index
    %256 = vector.load %arg11[%c0_68, %c0_69] : memref<32x64xbf16, #tpu.memory_space<vmem>>, vector<32x64xbf16>
    %cst_70 = arith.constant dense<0.000000e+00> : vector<16x64xf32>
    %257 = tpu.matmul %255, %256, %cst_70 {dimension_numbers = #tpu.dot_dimension_numbers<[1], [0], [0], [1], [0, 0, 1, 1], [], []>} : vector<16x32xbf16>, vector<32x64xbf16>, vector<16x64xf32> -> vector<16x64xf32>
    %c0_71 = arith.constant 0 : index
    %c0_72 = arith.constant 0 : index
    %258 = vector.load %arg12[%c0_71, %c0_72] : memref<1x64xf32, #tpu.memory_space<vmem>>, vector<1x64xf32>
    %259 = vector.broadcast %258 : vector<1x64xf32> to vector<16x64xf32>
    %260 = arith.addf %257, %259 : vector<16x64xf32>
    %cst_73 = arith.constant 0.000000e+00 : f32
    %261 = vector.broadcast %cst_73 : f32 to vector<16x64xf32>
    %262 = arith.maximumf %260, %261 : vector<16x64xf32>
    %263 = arith.truncf %262 : vector<16x64xf32> to vector<16x64xbf16>
    %c0_74 = arith.constant 0 : index
    %c0_75 = arith.constant 0 : index
    %264 = vector.load %arg13[%c0_74, %c0_75] : memref<64x32xbf16, #tpu.memory_space<vmem>>, vector<64x32xbf16>
    %cst_76 = arith.constant dense<0.000000e+00> : vector<16x32xf32>
    %265 = tpu.matmul %263, %264, %cst_76 {dimension_numbers = #tpu.dot_dimension_numbers<[1], [0], [0], [1], [0, 0, 1, 1], [], []>} : vector<16x64xbf16>, vector<64x32xbf16>, vector<16x32xf32> -> vector<16x32xf32>
    %266 = vector.broadcast %7 : vector<1x32xf32> to vector<16x32xf32>
    %267 = arith.addf %265, %266 : vector<16x32xf32>
    %268 = arith.addf %254, %267 : vector<16x32xf32>
    %cst_77 = arith.constant dense<0.000000e+00> : vector<16xf32>
    %269 = vector.multi_reduction <add>, %268, %cst_77 [1] : vector<16x32xf32> to vector<16xf32>
    %270 = vector.shape_cast %269 : vector<16xf32> to vector<16x1xf32>
    %cst_78 = arith.constant 3.200000e+01 : f32
    %271 = vector.broadcast %cst_78 : f32 to vector<16x1xf32>
    %272 = arith.divf %270, %271 : vector<16x1xf32>
    %273 = vector.broadcast %272 : vector<16x1xf32> to vector<16x32xf32>
    %274 = arith.subf %268, %273 : vector<16x32xf32>
    %275 = arith.mulf %274, %274 : vector<16x32xf32>
    %cst_79 = arith.constant dense<0.000000e+00> : vector<16xf32>
    %276 = vector.multi_reduction <add>, %275, %cst_79 [1] : vector<16x32xf32> to vector<16xf32>
    %277 = vector.shape_cast %276 : vector<16xf32> to vector<16x1xf32>
    %cst_80 = arith.constant 3.200000e+01 : f32
    %278 = vector.broadcast %cst_80 : f32 to vector<16x1xf32>
    %279 = arith.divf %277, %278 : vector<16x1xf32>
    %280 = vector.broadcast %272 : vector<16x1xf32> to vector<16x32xf32>
    %281 = arith.subf %268, %280 : vector<16x32xf32>
    %cst_81 = arith.constant 9.99999974E-6 : f32
    %282 = vector.broadcast %cst_81 : f32 to vector<16x1xf32>
    %283 = arith.addf %279, %282 : vector<16x1xf32>
    %284 = math.rsqrt %283 : vector<16x1xf32>
    %285 = vector.broadcast %284 : vector<16x1xf32> to vector<16x32xf32>
    %286 = arith.mulf %281, %285 : vector<16x32xf32>
    %287 = vector.broadcast %12 : vector<1x32xf32> to vector<16x32xf32>
    %288 = arith.mulf %286, %287 : vector<16x32xf32>
    %289 = vector.broadcast %13 : vector<1x32xf32> to vector<16x32xf32>
    %290 = arith.addf %288, %289 : vector<16x32xf32>
    %c0_82 = arith.constant 0 : index
    %c0_83 = arith.constant 0 : index
    %291 = vector.load %arg15[%c0_82, %c0_83] : memref<16x32xf32, #tpu.memory_space<vmem>>, vector<16x32xf32>
    tpu.vector_store %arg15[%c0_82, %c0_83], %290 {strides = array<i32>} : memref<16x32xf32, #tpu.memory_space<vmem>>, vector<16x32xf32>,
    %292 = vector.extract_strided_slice %231 {offsets = [0, 0], sizes = [8, 12], strides = [1, 1]} : vector<16x24xf32> to vector<8x12xf32>
    %293 = vector.extract_strided_slice %231 {offsets = [8, 12], sizes = [8, 12], strides = [1, 1]} : vector<16x24xf32> to vector<8x12xf32>
    %294 = vector.shape_cast %292 : vector<8x12xf32> to vector<1x8x12xf32>
    %295 = vector.shape_cast %293 : vector<8x12xf32> to vector<1x8x12xf32>
    %296 = tpu.concatenate %294, %295 in 0 : vector<1x8x12xf32>, vector<1x8x12xf32> -> vector<2x8x12xf32>
    %c0_84 = arith.constant 0 : index
    %c0_85 = arith.constant 0 : index
    %c0_86 = arith.constant 0 : index
    %297 = vector.load %arg16[%c0_84, %c0_85, %c0_86] : memref<2x8x12xf32, #tpu.memory_space<vmem>>, vector<2x8x12xf32>
    tpu.vector_store %arg16[%c0_84, %c0_85, %c0_86], %296 {strides = array<i32>} : memref<2x8x12xf32, #tpu.memory_space<vmem>>, vector<2x8x12xf32>,
    return
  }
  func.func @transform_0(%arg0: i32) -> (i32, i32) {
    %c0_i32 = arith.constant 0 : i32
    %c0_i32_0 = arith.constant 0 : i32
    %c0_i32_1 = arith.constant 0 : i32
    return %c0_i32, %c0_i32_0 : i32, i32
  }
  func.func @transform_1(%arg0: i32) -> (i32, i32) {
    %c0_i32 = arith.constant 0 : i32
    %c0_i32_0 = arith.constant 0 : i32
    %c0_i32_1 = arith.constant 0 : i32
    return %c0_i32, %c0_i32_0 : i32, i32
  }
  func.func @transform_2(%arg0: i32) -> (i32, i32) {
    %c0_i32 = arith.constant 0 : i32
    %c0_i32_0 = arith.constant 0 : i32
    %c0_i32_1 = arith.constant 0 : i32
    return %c0_i32, %c0_i32_0 : i32, i32
  }
  func.func @transform_3(%arg0: i32) -> (i32, i32) {
    %c0_i32 = arith.constant 0 : i32
    %c0_i32_0 = arith.constant 0 : i32
    %c0_i32_1 = arith.constant 0 : i32
    return %c0_i32, %c0_i32_0 : i32, i32
  }
  func.func @transform_4(%arg0: i32) -> (i32, i32) {
    %c0_i32 = arith.constant 0 : i32
    %c0_i32_0 = arith.constant 0 : i32
    %c0_i32_1 = arith.constant 0 : i32
    return %c0_i32, %c0_i32_0 : i32, i32
  }
  func.func @transform_5(%arg0: i32) -> (i32, i32, i32) {
    %c0_i32 = arith.constant 0 : i32
    %c0_i32_0 = arith.constant 0 : i32
    %c0_i32_1 = arith.constant 0 : i32
    %c0_i32_2 = arith.constant 0 : i32
    return %c0_i32, %c0_i32_0, %c0_i32_1 : i32, i32, i32
  }
  func.func @transform_6(%arg0: i32) -> (i32, i32) {
    %c0_i32 = arith.constant 0 : i32
    %c0_i32_0 = arith.constant 0 : i32
    %c0_i32_1 = arith.constant 0 : i32
    return %c0_i32, %c0_i32_0 : i32, i32
  }
  func.func @transform_7(%arg0: i32) -> (i32, i32) {
    %c0_i32 = arith.constant 0 : i32
    %c0_i32_0 = arith.constant 0 : i32
    %c0_i32_1 = arith.constant 0 : i32
    return %c0_i32, %c0_i32_0 : i32, i32
  }
  func.func @transform_8(%arg0: i32) -> (i32, i32) {
    %c0_i32 = arith.constant 0 : i32
    %c0_i32_0 = arith.constant 0 : i32
    %c0_i32_1 = arith.constant 0 : i32
    return %c0_i32, %c0_i32_0 : i32, i32
  }
  func.func @transform_9(%arg0: i32) -> (i32, i32, i32) {
    %c0_i32 = arith.constant 0 : i32
    %c0_i32_0 = arith.constant 0 : i32
    %c0_i32_1 = arith.constant 0 : i32
    %c0_i32_2 = arith.constant 0 : i32
    return %c0_i32, %c0_i32_0, %c0_i32_1 : i32, i32, i32
  }
  func.func @transform_10(%arg0: i32) -> (i32, i32) {
    %c0_i32 = arith.constant 0 : i32
    %c0_i32_0 = arith.constant 0 : i32
    %c0_i32_1 = arith.constant 0 : i32
    return %c0_i32, %c0_i32_0 : i32, i32
  }
  func.func @transform_11(%arg0: i32) -> (i32, i32) {
    %c0_i32 = arith.constant 0 : i32
    %c0_i32_0 = arith.constant 0 : i32
    %c0_i32_1 = arith.constant 0 : i32
    return %c0_i32, %c0_i32_0 : i32, i32
  }
  func.func @transform_12(%arg0: i32) -> (i32, i32) {
    %c0_i32 = arith.constant 0 : i32
    %c0_i32_0 = arith.constant 0 : i32
    %c0_i32_1 = arith.constant 0 : i32
    return %c0_i32, %c0_i32_0 : i32, i32
  }
  func.func @transform_13(%arg0: i32) -> (i32, i32) {
    %c0_i32 = arith.constant 0 : i32
    %c0_i32_0 = arith.constant 0 : i32
    %c0_i32_1 = arith.constant 0 : i32
    return %c0_i32, %c0_i32_0 : i32, i32
  }
  func.func @transform_14(%arg0: i32) -> (i32, i32) {
    %c0_i32 = arith.constant 0 : i32
    %c0_i32_0 = arith.constant 0 : i32
    %c0_i32_1 = arith.constant 0 : i32
    return %c0_i32, %c0_i32_0 : i32, i32
  }
  func.func @transform_15(%arg0: i32) -> (i32, i32, i32) {
    %c0_i32 = arith.constant 0 : i32
    %c0_i32_0 = arith.constant 0 : i32
    %c0_i32_1 = arith.constant 0 : i32
    %c0_i32_2 = arith.constant 0 : i32
    return %c0_i32, %c0_i32_0, %c0_i32_1 : i32, i32, i32
  }
}

</mosaic_0001>

<llo_original>
// kernel: tpu_custom_call.1
$region0: #{tpu_custom_call.1}
  #allocation0 [shape = 'u32[]', space=smem, size = 0x4, offset = 0x4, fixed_abs, tag = 'smem constant byte address 0x4 - core index']
  #allocation1 [shape = 'u32[72,128]{1,0:T(1,128)}', space=vmem, size = 0x9000, scoped, tag = 'internal scratch']
  %s0 = inlined_call_operand.vmem [shape: f32[16,32], index: 0, kind: input, shape index: {}]
  %s1 = inlined_call_operand.hbm [shape: bf16[24,32], index: 1, kind: input, shape index: {}]
  %s2 = inlined_call_operand.vmem [shape: f32[1,24], index: 2, kind: input, shape index: {}]
  %s3 = inlined_call_operand.vmem [shape: bf16[32,96], index: 3, kind: input, shape index: {}]
  %s4 = inlined_call_operand.vmem [shape: f32[1,96], index: 4, kind: input, shape index: {}]
  %s5 = inlined_call_operand.vmem [shape: bf16[4,8,32], index: 5, kind: input, shape index: {}]
  %s6 = inlined_call_operand.hbm [shape: bf16[32,32], index: 6, kind: input, shape index: {}]
  %s7 = inlined_call_operand.hbm [shape: bf16[32,64], index: 7, kind: input, shape index: {}]
  %s8 = inlined_call_operand.vmem [shape: f32[1,64], index: 8, kind: input, shape index: {}]
  %s9 = inlined_call_operand.hbm [shape: bf16[4,8,32], index: 9, kind: input, shape index: {}]
  %s10 = inlined_call_operand.hbm [shape: bf16[32,64], index: 10, kind: input, shape index: {}]
  %s11 = inlined_call_operand.vmem [shape: f32[1,64], index: 11, kind: input, shape index: {}]
  %s12 = inlined_call_operand.vmem [shape: bf16[64,32], index: 12, kind: input, shape index: {}]
  %s13 = inlined_call_operand.hbm [shape: f32[10,32], index: 13, kind: input, shape index: {}]
  %s14 = inlined_call_operand.hbm [shape: f32[16,32], index: 14, kind: output, shape index: {0}]
  %s15 = inlined_call_operand.hbm [shape: f32[2,8,12], index: 15, kind: output, shape index: {1}]
  %16 = xla_tuple %s14, %s15
  %s17 = sld [smem:[#allocation0]]
  $region98: #{tpu_custom_call.1} parent=0
    _
  %s19 = ssub.s32 1, %s17
  %s20 = scalar_select 0, %s19, %s17
  $region1: #{tpu_custom_call.1} parent=0
    #allocation2 [shape = 'u8[6144]{0}', space=vmem, size = 0x1800, scoped, tag = 'input window, operand 1, single buffered']
    #allocation3 [shape = 's32[1]{0}', space=sflag, size = 0x4, scoped, tag = 'scoped memory for tpu_custom_call.1']
    #allocation4 [shape = 's32[1]{0}', space=sflag, size = 0x4, scoped, tag = 'scoped memory for tpu_custom_call.1']
    #allocation5 [shape = 'u8[8192]{0}', space=vmem, size = 0x2000, scoped, tag = 'input window, operand 6, single buffered']
    #allocation6 [shape = 's32[1]{0}', space=sflag, size = 0x4, scoped, tag = 'scoped memory for tpu_custom_call.1']
    #allocation7 [shape = 'u8[8192]{0}', space=vmem, size = 0x2000, scoped, tag = 'input window, operand 7, single buffered']
    #allocation8 [shape = 'u8[8192]{0}', space=vmem, size = 0x2000, scoped, tag = 'input window, operand 9, single buffered']
    #allocation9 [shape = 's32[1]{0}', space=sflag, size = 0x4, scoped, tag = 'scoped memory for tpu_custom_call.1']
    #allocation10 [shape = 'u8[8192]{0}', space=vmem, size = 0x2000, scoped, tag = 'input window, operand 10, single buffered']
    #allocation11 [shape = 'u8[8192]{0}', space=vmem, size = 0x2000, scoped, tag = 'input window, operand 13, single buffered']
    #allocation12 [shape = 's32[1]{0}', space=sflag, size = 0x4, scoped, tag = 'scoped memory for tpu_custom_call.1']
    #allocation13 [shape = 'u8[8192]{0}', space=vmem, size = 0x2000, scoped, tag = 'output window, operand 0, single buffered']
    #allocation14 [shape = 'u8[8192]{0}', space=vmem, size = 0x2000, scoped, tag = 'output window, operand 1, single buffered']
    #allocation15 [shape = 's32[1]{0}', space=sflag, size = 0x4, scoped, tag = 'scoped memory for tpu_custom_call.1']
    %21 = vsyncpa [#allocation3], 0
    %22 = vsyncpa [#allocation6], 0
    %23 = vsyncpa [#allocation9], 0
    %24 = vsyncpa [#allocation12], 0
    %25 = vsyncpa [#allocation4], 0
    %26 = vsyncpa [#allocation15], 0
    // Predicated region
    $region2: #{tpu_custom_call.1} parent=1 // pred_check
      _
    $region3: #{tpu_custom_call.1} parent=1 // pred_check_branch
      %28 = sbr.rel (0) target = $region5
    $region4: #{tpu_custom_call.1} parent=1 // pred_region
      _
    $region5: #{tpu_custom_call.1} parent=1 // pred_fallthru
      _
    // Predicated region
    $region6: #{tpu_custom_call.1} parent=1 // pred_check
      _
    $region7: #{tpu_custom_call.1} parent=1 // pred_check_branch
      %30 = sbr.rel (0) target = $region9
    $region8: #{tpu_custom_call.1} parent=1 // pred_region
      %32 = vsyncadd [#allocation3], 0
      %s33 = sshll.u32 %s1, 4
      %s34 = int_to_ptr.hbm [resolvable:$true] %s33
      %s35 = sshll.u32 [#allocation2], 4
      %s36 = int_to_ptr.vmem [resolvable:$true] %s35
      %41 = dma.hbm_to_vmem [thread:$0]  %s34, 192, %s36, [#allocation3], 64, 64, 4
    $region9: #{tpu_custom_call.1} parent=1 // pred_fallthru
      _
    // Predicated region
    $region10: #{tpu_custom_call.1} parent=1 // pred_check
      _
    $region11: #{tpu_custom_call.1} parent=1 // pred_check_branch
      %43 = sbr.rel (0) target = $region13
    $region12: #{tpu_custom_call.1} parent=1 // pred_region
      _
    $region13: #{tpu_custom_call.1} parent=1 // pred_fallthru
      _
    // Predicated region
    $region14: #{tpu_custom_call.1} parent=1 // pred_check
      _
    $region15: #{tpu_custom_call.1} parent=1 // pred_check_branch
      %45 = sbr.rel (0) target = $region17
    $region16: #{tpu_custom_call.1} parent=1 // pred_region
      _
    $region17: #{tpu_custom_call.1} parent=1 // pred_fallthru
      _
    // Predicated region
    $region18: #{tpu_custom_call.1} parent=1 // pred_check
      _
    $region19: #{tpu_custom_call.1} parent=1 // pred_check_branch
      %47 = sbr.rel (0) target = $region21
    $region20: #{tpu_custom_call.1} parent=1 // pred_region
      _
    $region21: #{tpu_custom_call.1} parent=1 // pred_fallthru
      _
    // Predicated region
    $region22: #{tpu_custom_call.1} parent=1 // pred_check
      _
    $region23: #{tpu_custom_call.1} parent=1 // pred_check_branch
      %49 = sbr.rel (0) target = $region25
    $region24: #{tpu_custom_call.1} parent=1 // pred_region
      _
    $region25: #{tpu_custom_call.1} parent=1 // pred_fallthru
      _
    // Predicated region
    $region26: #{tpu_custom_call.1} parent=1 // pred_check
      _
    $region27: #{tpu_custom_call.1} parent=1 // pred_check_branch
      %51 = sbr.rel (0) target = $region29
    $region28: #{tpu_custom_call.1} parent=1 // pred_region
      %53 = vsyncadd [#allocation6], 0
      %s54 = sshll.u32 %s6, 4
      %s55 = int_to_ptr.hbm [resolvable:$true] %s54
      %s56 = sshll.u32 [#allocation5], 4
      %s57 = int_to_ptr.vmem [resolvable:$true] %s56
      %62 = dma.hbm_to_vmem [thread:$0]  %s55, 256, %s57, [#allocation6], 64, 64, 4
    $region29: #{tpu_custom_call.1} parent=1 // pred_fallthru
      _
    // Predicated region
    $region30: #{tpu_custom_call.1} parent=1 // pred_check
      _
    $region31: #{tpu_custom_call.1} parent=1 // pred_check_branch
      %64 = sbr.rel (0) target = $region33
    $region32: #{tpu_custom_call.1} parent=1 // pred_region
      %66 = vsyncadd [#allocation6], 0
      %s67 = sshll.u32 %s7, 4
      %s68 = int_to_ptr.hbm [resolvable:$true] %s67
      %s69 = sshll.u32 [#allocation7], 4
      %s70 = int_to_ptr.vmem [resolvable:$true] %s69
      %75 = dma.hbm_to_vmem [thread:$0]  %s68, 256, %s70, [#allocation6], 64, 64, 4
    $region33: #{tpu_custom_call.1} parent=1 // pred_fallthru
      _
    // Predicated region
    $region34: #{tpu_custom_call.1} parent=1 // pred_check
      _
    $region35: #{tpu_custom_call.1} parent=1 // pred_check_branch
      %77 = sbr.rel (0) target = $region37
    $region36: #{tpu_custom_call.1} parent=1 // pred_region
      _
    $region37: #{tpu_custom_call.1} parent=1 // pred_fallthru
      _
    // Predicated region
    $region38: #{tpu_custom_call.1} parent=1 // pred_check
      _
    $region39: #{tpu_custom_call.1} parent=1 // pred_check_branch
      %79 = sbr.rel (0) target = $region41
    $region40: #{tpu_custom_call.1} parent=1 // pred_region
      %81 = vsyncadd [#allocation9], 0
      %s82 = sshll.u32 %s9, 4
      %s83 = int_to_ptr.hbm [resolvable:$true] %s82
      %s84 = sshll.u32 [#allocation8], 4
      %s85 = int_to_ptr.vmem [resolvable:$true] %s84
      %90 = dma.hbm_to_vmem [thread:$0]  %s83, 256, %s85, [#allocation9], 64, 64, 4
    $region41: #{tpu_custom_call.1} parent=1 // pred_fallthru
      _
    // Predicated region
    $region42: #{tpu_custom_call.1} parent=1 // pred_check
      _
    $region43: #{tpu_custom_call.1} parent=1 // pred_check_branch
      %92 = sbr.rel (0) target = $region45
    $region44: #{tpu_custom_call.1} parent=1 // pred_region
      %94 = vsyncadd [#allocation9], 0
      %s95 = sshll.u32 %s10, 4
      %s96 = int_to_ptr.hbm [resolvable:$true] %s95
      %s97 = sshll.u32 [#allocation10], 4
      %s98 = int_to_ptr.vmem [resolvable:$true] %s97
      %103 = dma.hbm_to_vmem [thread:$0]  %s96, 256, %s98, [#allocation9], 64, 64, 4
    $region45: #{tpu_custom_call.1} parent=1 // pred_fallthru
      _
    // Predicated region
    $region46: #{tpu_custom_call.1} parent=1 // pred_check
      _
    $region47: #{tpu_custom_call.1} parent=1 // pred_check_branch
      %105 = sbr.rel (0) target = $region49
    $region48: #{tpu_custom_call.1} parent=1 // pred_region
      _
    $region49: #{tpu_custom_call.1} parent=1 // pred_fallthru
      _
    // Predicated region
    $region50: #{tpu_custom_call.1} parent=1 // pred_check
      _
    $region51: #{tpu_custom_call.1} parent=1 // pred_check_branch
      %107 = sbr.rel (0) target = $region53
    $region52: #{tpu_custom_call.1} parent=1 // pred_region
      _
    $region53: #{tpu_custom_call.1} parent=1 // pred_fallthru
      _
    // Predicated region
    $region54: #{tpu_custom_call.1} parent=1 // pred_check
      _
    $region55: #{tpu_custom_call.1} parent=1 // pred_check_branch
      %109 = sbr.rel (0) target = $region57
    $region56: #{tpu_custom_call.1} parent=1 // pred_region
      %111 = vsyncadd [#allocation12], 0
      %s112 = sshll.u32 %s13, 4
      %s113 = int_to_ptr.hbm [resolvable:$true] %s112
      %s114 = sshll.u32 [#allocation11], 4
      %s115 = int_to_ptr.vmem [resolvable:$true] %s114
      %120 = dma.hbm_to_vmem [thread:$0]  %s113, 256, %s115, [#allocation12], 128, 128, 8
    $region57: #{tpu_custom_call.1} parent=1 // pred_fallthru
      _
    // Predicated region
    $region58: #{tpu_custom_call.1} parent=1 // pred_check
      _
    $region59: #{tpu_custom_call.1} parent=1 // pred_check_branch
      %122 = sbr.rel (0) target = $region61
    $region60: #{tpu_custom_call.1} parent=1 // pred_region
      %124 = dma.done [#allocation3], 192
    $region61: #{tpu_custom_call.1} parent=1 // pred_fallthru
      _
    // Predicated region
    $region62: #{tpu_custom_call.1} parent=1 // pred_check
      _
    $region63: #{tpu_custom_call.1} parent=1 // pred_check_branch
      %126 = sbr.rel (0) target = $region65
    $region64: #{tpu_custom_call.1} parent=1 // pred_region
      %128 = dma.done [#allocation6], 256
    $region65: #{tpu_custom_call.1} parent=1 // pred_fallthru
      _
    // Predicated region
    $region66: #{tpu_custom_call.1} parent=1 // pred_check
      _
    $region67: #{tpu_custom_call.1} parent=1 // pred_check_branch
      %130 = sbr.rel (0) target = $region69
    $region68: #{tpu_custom_call.1} parent=1 // pred_region
      %132 = dma.done [#allocation6], 256
    $region69: #{tpu_custom_call.1} parent=1 // pred_fallthru
      _
    // Predicated region
    $region70: #{tpu_custom_call.1} parent=1 // pred_check
      _
    $region71: #{tpu_custom_call.1} parent=1 // pred_check_branch
      %134 = sbr.rel (0) target = $region73
    $region72: #{tpu_custom_call.1} parent=1 // pred_region
      %136 = dma.done [#allocation9], 256
    $region73: #{tpu_custom_call.1} parent=1 // pred_fallthru
      _
    // Predicated region
    $region74: #{tpu_custom_call.1} parent=1 // pred_check
      _
    $region75: #{tpu_custom_call.1} parent=1 // pred_check_branch
      %138 = sbr.rel (0) target = $region77
    $region76: #{tpu_custom_call.1} parent=1 // pred_region
      %140 = dma.done [#allocation9], 256
    $region77: #{tpu_custom_call.1} parent=1 // pred_fallthru
      _
    // Predicated region
    $region78: #{tpu_custom_call.1} parent=1 // pred_check
      _
    $region79: #{tpu_custom_call.1} parent=1 // pred_check_branch
      %142 = sbr.rel (0) target = $region81
    $region80: #{tpu_custom_call.1} parent=1 // pred_region
      %144 = dma.done [#allocation12], 256
    $region81: #{tpu_custom_call.1} parent=1 // pred_fallthru
      _
    %v146 = vld [vmem:[%s0] sm:$0xff]
    %v147 = vld [vmem:[%s0 + $0x8] sm:$0xff]
    %v148 = vld [vmem:[#allocation2] sm:$0xf]
    %v149 = vld [vmem:[#allocation2 + $0x4] sm:$0xf]
    %v150 = vld [vmem:[#allocation2 + $0x8] sm:$0xf]
    %v151 = vld [vmem:[%s2] sm:$0x1]
    %v152 = vld [vmem:[#allocation11] sm:$0xff]
    %v153 = vld [vmem:[#allocation11 + $0x8] sm:$0x3]
    %v154 = vlaneseq
    %v155 = vshrl.u32 %v154, 7
    %v156 = vadd.s32 %v155, 8
    %v157 = vlaneseq
    %v158 = vand.u32 %v157, 127
    %vm159 = vcmp.le.s32.totalorder %v158, %v155
    %vm160 = vcmp.le.s32.totalorder %v158, %v156
    %vm161 = vcmp.ge.s32.totalorder %v155, 0
    %vm162 = vcmp.ge.s32.totalorder %v156, 0
    %vm163 = vcmp.lt.s32.totalorder %v155, 8
    %vm164 = vcmp.lt.s32.totalorder %v156, 8
    %vm165 = vmand %vm161, %vm163
    %vm166 = vmand %vm162, %vm164
    %vm167 = vcmp.ge.s32.totalorder %v158, 0
    %vm168 = vmand %vm165, %vm167
    %vm169 = vmand %vm166, %vm167
    %vm170 = vcmp.lt.s32.totalorder %v158, 8
    %vm171 = vmand %vm168, %vm170
    %vm172 = vmand %vm169, %vm170
    %vm173 = vmand %vm171, %vm159
    %vm174 = vmand %vm172, %vm160
    %v175 = vsel %vm173, 0.0, -1e+09
    %v176 = vsel %vm174, 0.0, -1e+09
    %vm177 = vcmp.ge.s32.totalorder %v155, 8
    %vm178 = vcmp.ge.s32.totalorder %v156, 8
    %vm179 = vcmp.lt.s32.totalorder %v155, 16
    %vm180 = vcmp.lt.s32.totalorder %v156, 16
    %vm181 = vmand %vm177, %vm179
    %vm182 = vmand %vm178, %vm180
    %vm183 = vcmp.ge.s32.totalorder %v158, 8
    %vm184 = vmand %vm181, %vm183
    %vm185 = vmand %vm182, %vm183
    %vm186 = vcmp.lt.s32.totalorder %v158, 16
    %vm187 = vmand %vm184, %vm186
    %vm188 = vmand %vm185, %vm186
    %vm189 = vmand %vm187, %vm159
    %vm190 = vmand %vm188, %vm160
    %v191 = vsel %vm189, 0.0, %v175
    %v192 = vsel %vm190, 0.0, %v176
    %vm193 = vcmp.lt.s32.totalorder %v158, 12
    %vm194 = vmand %vm168, %vm193
    %vm195 = vmand %vm169, %vm193
    %v196 = vsel %vm194, 0.0, -1e+09
    %v197 = vsel %vm195, 0.0, -1e+09
    %vm198 = vcmp.ge.s32.totalorder %v158, 12
    %vm199 = vmand %vm181, %vm198
    %vm200 = vmand %vm182, %vm198
    %vm201 = vcmp.lt.s32.totalorder %v158, 24
    %vm202 = vmand %vm199, %vm201
    %vm203 = vmand %vm200, %vm201
    %v204 = vsel %vm202, 0.0, %v196
    %v205 = vsel %vm203, 0.0, %v197
    %v207 = vperm.slane %v151, 0
    %v209 = vadd.f32 %v204, %v207
    %v210 = vadd.f32 %v205, %v207
    %v211 = vpack.c.bf16 %v147, %v146
    %v212 = vld [vmem:[%s3] sm:$0xf]
    %v213 = vld [vmem:[%s3 + $0x4] sm:$0xf]
    %v214 = vld [vmem:[%s3 + $0x8] sm:$0xf]
    %v215 = vld [vmem:[%s3 + $0xc] sm:$0xf]
    %v216 = vld [vmem:[%s4] sm:$0x1]
    %v218 = vperm.slane %v216, 0
    %v224 = vunpack.c.l.b16 %v212
    %v225 = vunpack.c.l.b16 %v213
    %v226 = vunpack.c.l.b16 %v214
    %v227 = vunpack.c.l.b16 %v215
    %v228 = vpack.c.b16 %v225, %v224
    %v229 = vpack.c.b16 %v227, %v226
    %vm232 = vcmask 261120
    %v234 = vsel %vm232, %v211, 0
    %236 = vmatpush.bf16.msra.mxu0 0
    %237 = vmatpush.bf16.msra.mxu0 0
    %238 = vmatpush.bf16.msra.mxu0 0
    %239 = vmatpush.bf16.msra.mxu0 0
    %240 = vmatpush.bf16.msra.mxu0 0
    %241 = vmatpush.bf16.msra.mxu0 0
    %242 = vmatpush.bf16.msra.mxu0 %v229
    %243 = vmatpush.bf16.msra.mxu0 %v228
    %244 = vmatmul.bf16.gmra.mxu0 %v234
    %v245 = vpop.f32.mrf.mxu0
    %v246 = vadd.f32 %v218, %v245
    %v247 = vpop.f32.mrf.mxu0
    %v248 = vadd.f32 %v218, %v247
    %249 = vdwg.mxu0
    %v250 = vmul.f32 %v246, 0.35355338
    %v251 = vmul.f32 %v248, 0.35355338
    %v252 = vpack.c.bf16 %v250, %v250
    %v253 = vpack.c.bf16 %v251, %v251
    %256 = vrot.lane.b32.xlu0 %v252, 120
    %v257 = vpop.permute.xlu0 %256
    %258 = vrot.lane.b32.xlu0 %v253, 120
    %v259 = vpop.permute.xlu0 %258
    %260 = vrot.lane.b32.xlu0 %v252, 112
    %v261 = vpop.permute.xlu0 %260
    %262 = vrot.lane.b32.xlu0 %v253, 112
    %v263 = vpop.permute.xlu0 %262
    %264 = vrot.lane.b32.xlu0 %v252, 104
    %v265 = vpop.permute.xlu0 %264
    %266 = vrot.lane.b32.xlu0 %v253, 104
    %v267 = vpop.permute.xlu0 %266
    %v268 = vpack.c.bf16 %v246, %v246
    %v269 = vpack.c.bf16 %v248, %v248
    %272 = vrot.lane.b32.xlu0 %v268, 120
    %v273 = vpop.permute.xlu0 %272
    %274 = vrot.lane.b32.xlu0 %v269, 120
    %v275 = vpop.permute.xlu0 %274
    %276 = vrot.lane.b32.xlu0 %v268, 112
    %v277 = vpop.permute.xlu0 %276
    %278 = vrot.lane.b32.xlu0 %v269, 112
    %v279 = vpop.permute.xlu0 %278
    %280 = vrot.lane.b32.xlu0 %v268, 104
    %v281 = vpop.permute.xlu0 %280
    %282 = vrot.lane.b32.xlu0 %v269, 104
    %v283 = vpop.permute.xlu0 %282
    %v284 = vunpack.c.l.b16 %v252
    %v285 = vunpack.c.l.b16 %v253
    %v286 = vpack.c.b16 %v285, %v284
    %v287 = vunpack.c.l.b16 %v268
    %v288 = vunpack.c.l.b16 %v269
    %v289 = vpack.c.b16 %v288, %v287
    %290 = vrot.lane.b32.xlu0 %v289, 96
    %v291 = vpop.permute.xlu0 %290
    %vm292 = vcmask 64512
    %v294 = vsel %vm292, %v286, 0
    %v297 = vsel %vm292, %v291, 0
    %299 = vmatpush.bf16.xpose.msra.mxu0 0
    %300 = vmatpush.bf16.xpose.msra.mxu0 0
    %301 = vmatpush.bf16.xpose.msra.mxu0 0
    %302 = vmatpush.bf16.xpose.msra.mxu0 0
    %303 = vmatpush.bf16.xpose.msra.mxu0 0
    %304 = vmatpush.bf16.xpose.msra.mxu0 0
    %305 = vmatpush.bf16.xpose.msra.mxu0 0
    %306 = vmatpush.bf16.xpose.msra.mxu0 %v297
    %307 = vmatmul.bf16.gmra.mxu0 %v294
    %v308 = vpop.f32.mrf.mxu0
    %v309 = vadd.f32 %v191, %v308
    %v310 = vpop.f32.mrf.mxu0
    %v311 = vadd.f32 %v192, %v310
    %312 = vdwg.mxu0
    %v313 = vunpack.c.l.b16 %v257
    %v314 = vunpack.c.l.b16 %v259
    %v315 = vpack.c.b16 %v314, %v313
    %v316 = vunpack.c.l.b16 %v273
    %v317 = vunpack.c.l.b16 %v275
    %v318 = vpack.c.b16 %v317, %v316
    %319 = vrot.lane.b32.xlu0 %v318, 96
    %v320 = vpop.permute.xlu0 %319
    %v322 = vsel %vm292, %v315, 0
    %v325 = vsel %vm292, %v320, 0
    %327 = vmatpush.bf16.xpose.msra.mxu0 0
    %328 = vmatpush.bf16.xpose.msra.mxu0 0
    %329 = vmatpush.bf16.xpose.msra.mxu0 0
    %330 = vmatpush.bf16.xpose.msra.mxu0 0
    %331 = vmatpush.bf16.xpose.msra.mxu0 0
    %332 = vmatpush.bf16.xpose.msra.mxu0 0
    %333 = vmatpush.bf16.xpose.msra.mxu0 0
    %334 = vmatpush.bf16.xpose.msra.mxu0 %v325
    %335 = vmatmul.bf16.gmra.mxu0 %v322
    %v336 = vpop.f32.mrf.mxu0
    %v337 = vadd.f32 %v191, %v336
    %v338 = vpop.f32.mrf.mxu0
    %v339 = vadd.f32 %v192, %v338
    %340 = vdwg.mxu0
    %v341 = vunpack.c.l.b16 %v261
    %v342 = vunpack.c.l.b16 %v263
    %v343 = vpack.c.b16 %v342, %v341
    %v344 = vunpack.c.l.b16 %v277
    %v345 = vunpack.c.l.b16 %v279
    %v346 = vpack.c.b16 %v345, %v344
    %347 = vrot.lane.b32.xlu0 %v346, 96
    %v348 = vpop.permute.xlu0 %347
    %v350 = vsel %vm292, %v343, 0
    %v353 = vsel %vm292, %v348, 0
    %355 = vmatpush.bf16.xpose.msra.mxu0 0
    %356 = vmatpush.bf16.xpose.msra.mxu0 0
    %357 = vmatpush.bf16.xpose.msra.mxu0 0
    %358 = vmatpush.bf16.xpose.msra.mxu0 0
    %359 = vmatpush.bf16.xpose.msra.mxu0 0
    %360 = vmatpush.bf16.xpose.msra.mxu0 0
    %361 = vmatpush.bf16.xpose.msra.mxu0 0
    %362 = vmatpush.bf16.xpose.msra.mxu0 %v353
    %363 = vmatmul.bf16.gmra.mxu0 %v350
    %v364 = vpop.f32.mrf.mxu0
    %v365 = vadd.f32 %v191, %v364
    %v366 = vpop.f32.mrf.mxu0
    %v367 = vadd.f32 %v192, %v366
    %368 = vdwg.mxu0
    %v369 = vunpack.c.l.b16 %v265
    %v370 = vunpack.c.l.b16 %v267
    %v371 = vpack.c.b16 %v370, %v369
    %v372 = vunpack.c.l.b16 %v281
    %v373 = vunpack.c.l.b16 %v283
    %v374 = vpack.c.b16 %v373, %v372
    %375 = vrot.lane.b32.xlu0 %v374, 96
    %v376 = vpop.permute.xlu0 %375
    %v378 = vsel %vm292, %v371, 0
    %v381 = vsel %vm292, %v376, 0
    %383 = vmatpush.bf16.xpose.msra.mxu0 0
    %384 = vmatpush.bf16.xpose.msra.mxu0 0
    %385 = vmatpush.bf16.xpose.msra.mxu0 0
    %386 = vmatpush.bf16.xpose.msra.mxu0 0
    %387 = vmatpush.bf16.xpose.msra.mxu0 0
    %388 = vmatpush.bf16.xpose.msra.mxu0 0
    %389 = vmatpush.bf16.xpose.msra.mxu0 0
    %390 = vmatpush.bf16.xpose.msra.mxu0 %v381
    %391 = vmatmul.bf16.gmra.mxu0 %v378
    %v392 = vpop.f32.mrf.mxu0
    %v393 = vadd.f32 %v191, %v392
    %v394 = vpop.f32.mrf.mxu0
    %v395 = vadd.f32 %v192, %v394
    %396 = vdwg.mxu0
    %vm397 = vcmask 130048
    %v398 = vsel %vm397, %v309, -inf
    %399 = vmax.xlane.f32.xlu0 %v398
    %v400 = vpop.xlane.xlu0 %399
    %v401 = vsel %vm397, %v311, -inf
    %402 = vmax.xlane.f32.xlu0 %v401
    %v403 = vpop.xlane.xlu0 %402
    %v404 = vsel %vm397, %v337, -inf
    %405 = vmax.xlane.f32.xlu0 %v404
    %v406 = vpop.xlane.xlu0 %405
    %v407 = vsel %vm397, %v339, -inf
    %408 = vmax.xlane.f32.xlu0 %v407
    %v409 = vpop.xlane.xlu0 %408
    %v410 = vsel %vm397, %v365, -inf
    %411 = vmax.xlane.f32.xlu0 %v410
    %v412 = vpop.xlane.xlu0 %411
    %v413 = vsel %vm397, %v367, -inf
    %414 = vmax.xlane.f32.xlu0 %v413
    %v415 = vpop.xlane.xlu0 %414
    %v416 = vsel %vm397, %v393, -inf
    %417 = vmax.xlane.f32.xlu0 %v416
    %v418 = vpop.xlane.xlu0 %417
    %v419 = vsel %vm397, %v395, -inf
    %420 = vmax.xlane.f32.xlu0 %v419
    %v421 = vpop.xlane.xlu0 %420
    %v422 = vsub.f32 %v309, %v400
    %v423 = vsub.f32 %v311, %v403
    %v424 = vsub.f32 %v337, %v406
    %v425 = vsub.f32 %v339, %v409
    %v426 = vsub.f32 %v365, %v412
    %v427 = vsub.f32 %v367, %v415
    %v428 = vsub.f32 %v393, %v418
    %v429 = vsub.f32 %v395, %v421
    %v430 = vmul.f32 %v422, 1.442695
    %v431 = vpow.pop %v430
    %v432 = vmul.f32 %v423, 1.442695
    %v433 = vpow.pop %v432
    %v434 = vmul.f32 %v424, 1.442695
    %v435 = vpow.pop %v434
    %v436 = vmul.f32 %v425, 1.442695
    %v437 = vpow.pop %v436
    %v438 = vmul.f32 %v426, 1.442695
    %v439 = vpow.pop %v438
    %v440 = vmul.f32 %v427, 1.442695
    %v441 = vpow.pop %v440
    %v442 = vmul.f32 %v428, 1.442695
    %v443 = vpow.pop %v442
    %v444 = vmul.f32 %v429, 1.442695
    %v445 = vpow.pop %v444
    %v446 = vsel %vm397, %v431, 0.0
    %447 = vadd.xlane.f32.xlu0 %v446
    %v448 = vpop.xlane.xlu0 %447
    %v449 = vsel %vm397, %v433, 0.0
    %450 = vadd.xlane.f32.xlu0 %v449
    %v451 = vpop.xlane.xlu0 %450
    %v452 = vsel %vm397, %v435, 0.0
    %453 = vadd.xlane.f32.xlu0 %v452
    %v454 = vpop.xlane.xlu0 %453
    %v455 = vsel %vm397, %v437, 0.0
    %456 = vadd.xlane.f32.xlu0 %v455
    %v457 = vpop.xlane.xlu0 %456
    %v458 = vsel %vm397, %v439, 0.0
    %459 = vadd.xlane.f32.xlu0 %v458
    %v460 = vpop.xlane.xlu0 %459
    %v461 = vsel %vm397, %v441, 0.0
    %462 = vadd.xlane.f32.xlu0 %v461
    %v463 = vpop.xlane.xlu0 %462
    %v464 = vsel %vm397, %v443, 0.0
    %465 = vadd.xlane.f32.xlu0 %v464
    %v466 = vpop.xlane.xlu0 %465
    %v467 = vsel %vm397, %v445, 0.0
    %468 = vadd.xlane.f32.xlu0 %v467
    %v469 = vpop.xlane.xlu0 %468
    %v470 = vrcp.pop %v448
    %v471 = vrcp.pop %v451
    %v472 = vrcp.pop %v454
    %v473 = vrcp.pop %v457
    %v474 = vrcp.pop %v460
    %v475 = vrcp.pop %v463
    %v476 = vrcp.pop %v466
    %v477 = vrcp.pop %v469
    %v478 = vmul.f32 %v431, %v470
    %v479 = vmul.f32 %v433, %v471
    %v480 = vmul.f32 %v435, %v472
    %v481 = vmul.f32 %v437, %v473
    %v482 = vmul.f32 %v439, %v474
    %v483 = vmul.f32 %v441, %v475
    %v484 = vmul.f32 %v443, %v476
    %v485 = vmul.f32 %v445, %v477
    %v486 = vpack.c.bf16 %v478, %v478
    %v487 = vpack.c.bf16 %v479, %v479
    %v488 = vpack.c.bf16 %v480, %v480
    %v489 = vpack.c.bf16 %v481, %v481
    %v490 = vpack.c.bf16 %v482, %v482
    %v491 = vpack.c.bf16 %v483, %v483
    %v492 = vpack.c.bf16 %v484, %v484
    %v493 = vpack.c.bf16 %v485, %v485
    %v496 = vunpack.c.l.b16 %v486
    %v497 = vunpack.c.l.b16 %v487
    %v498 = vpack.c.b16 %v497, %v496
    %499 = vrot.lane.b32.xlu0 %v289, 64
    %v500 = vpop.permute.xlu0 %499
    %v503 = vsel %vm397, %v498, 0
    %505 = vmatpush.bf16.msra.mxu0 0
    %506 = vmatpush.bf16.msra.mxu0 0
    %507 = vmatpush.bf16.msra.mxu0 0
    %508 = vmatpush.bf16.msra.mxu0 0
    %509 = vmatpush.bf16.msra.mxu0 0
    %510 = vmatpush.bf16.msra.mxu0 0
    %511 = vmatpush.bf16.msra.mxu0 0
    %512 = vmatpush.bf16.msra.mxu0 %v500
    %513 = vmatmul.bf16.gmra.mxu0 %v503
    %v514 = vpop.f32.mrf.mxu0
    %v515 = vadd.f32 0.0, %v514
    %v516 = vpop.f32.mrf.mxu0
    %v517 = vadd.f32 0.0, %v516
    %518 = vdwg.mxu0
    %v521 = vunpack.c.l.b16 %v488
    %v522 = vunpack.c.l.b16 %v489
    %v523 = vpack.c.b16 %v522, %v521
    %524 = vrot.lane.b32.xlu0 %v318, 64
    %v525 = vpop.permute.xlu0 %524
    %v528 = vsel %vm397, %v523, 0
    %530 = vmatpush.bf16.msra.mxu0 0
    %531 = vmatpush.bf16.msra.mxu0 0
    %532 = vmatpush.bf16.msra.mxu0 0
    %533 = vmatpush.bf16.msra.mxu0 0
    %534 = vmatpush.bf16.msra.mxu0 0
    %535 = vmatpush.bf16.msra.mxu0 0
    %536 = vmatpush.bf16.msra.mxu0 0
    %537 = vmatpush.bf16.msra.mxu0 %v525
    %538 = vmatmul.bf16.gmra.mxu0 %v528
    %v539 = vpop.f32.mrf.mxu0
    %v540 = vadd.f32 0.0, %v539
    %v541 = vpop.f32.mrf.mxu0
    %v542 = vadd.f32 0.0, %v541
    %543 = vdwg.mxu0
    %v546 = vunpack.c.l.b16 %v490
    %v547 = vunpack.c.l.b16 %v491
    %v548 = vpack.c.b16 %v547, %v546
    %549 = vrot.lane.b32.xlu0 %v346, 64
    %v550 = vpop.permute.xlu0 %549
    %v553 = vsel %vm397, %v548, 0
    %555 = vmatpush.bf16.msra.mxu0 0
    %556 = vmatpush.bf16.msra.mxu0 0
    %557 = vmatpush.bf16.msra.mxu0 0
    %558 = vmatpush.bf16.msra.mxu0 0
    %559 = vmatpush.bf16.msra.mxu0 0
    %560 = vmatpush.bf16.msra.mxu0 0
    %561 = vmatpush.bf16.msra.mxu0 0
    %562 = vmatpush.bf16.msra.mxu0 %v550
    %563 = vmatmul.bf16.gmra.mxu0 %v553
    %v564 = vpop.f32.mrf.mxu0
    %v565 = vadd.f32 0.0, %v564
    %v566 = vpop.f32.mrf.mxu0
    %v567 = vadd.f32 0.0, %v566
    %568 = vdwg.mxu0
    %v571 = vunpack.c.l.b16 %v492
    %v572 = vunpack.c.l.b16 %v493
    %v573 = vpack.c.b16 %v572, %v571
    %574 = vrot.lane.b32.xlu0 %v374, 64
    %v575 = vpop.permute.xlu0 %574
    %v578 = vsel %vm397, %v573, 0
    %580 = vmatpush.bf16.msra.mxu0 0
    %581 = vmatpush.bf16.msra.mxu0 0
    %582 = vmatpush.bf16.msra.mxu0 0
    %583 = vmatpush.bf16.msra.mxu0 0
    %584 = vmatpush.bf16.msra.mxu0 0
    %585 = vmatpush.bf16.msra.mxu0 0
    %586 = vmatpush.bf16.msra.mxu0 0
    %587 = vmatpush.bf16.msra.mxu0 %v575
    %588 = vmatmul.bf16.gmra.mxu0 %v578
    %v589 = vpop.f32.mrf.mxu0
    %v590 = vadd.f32 0.0, %v589
    %v591 = vpop.f32.mrf.mxu0
    %v592 = vadd.f32 0.0, %v591
    %593 = vdwg.mxu0
    %v594 = vpack.c.bf16 %v515, %v515
    %v595 = vpack.c.bf16 %v517, %v517
    %v596 = vpack.c.bf16 %v540, %v540
    %v597 = vpack.c.bf16 %v542, %v542
    %v598 = vpack.c.bf16 %v565, %v565
    %v599 = vpack.c.bf16 %v567, %v567
    %v600 = vpack.c.bf16 %v590, %v590
    %v601 = vpack.c.bf16 %v592, %v592
    %v602 = vld [vmem:[%s5] sm:$0xf]
    %v603 = vld [vmem:[%s5 + $0x4] sm:$0xf]
    %v604 = vld [vmem:[%s5 + $0x8] sm:$0xf]
    %v605 = vld [vmem:[%s5 + $0xc] sm:$0xf]
    %v608 = vunpack.c.l.b16 %v594
    %v609 = vunpack.c.l.b16 %v595
    %v610 = vpack.c.b16 %v609, %v608
    %v612 = vsel %vm292, %v610, 0
    %vm614 = vcmask 1043456
    %v616 = vsel %vm614, %v602, 0
    %618 = vmatpush.bf16.msra.mxu0 0
    %619 = vmatpush.bf16.msra.mxu0 0
    %620 = vmatpush.bf16.msra.mxu0 0
    %621 = vmatpush.bf16.msra.mxu0 0
    %622 = vmatpush.bf16.msra.mxu0 0
    %623 = vmatpush.bf16.msra.mxu0 0
    %624 = vmatpush.bf16.msra.mxu0 0
    %625 = vmatpush.bf16.msra.mxu0 %v616
    %626 = vmatmul.bf16.gmra.mxu0 %v612
    %v627 = vpop.f32.mrf.mxu0
    %v628 = vadd.f32 0.0, %v627
    %v629 = vpop.f32.mrf.mxu0
    %v630 = vadd.f32 0.0, %v629
    %631 = vdwg.mxu0
    %v634 = vunpack.c.l.b16 %v596
    %v635 = vunpack.c.l.b16 %v597
    %v636 = vpack.c.b16 %v635, %v634
    %v638 = vsel %vm292, %v636, 0
    %v641 = vsel %vm614, %v603, 0
    %643 = vmatpush.bf16.msra.mxu0 0
    %644 = vmatpush.bf16.msra.mxu0 0
    %645 = vmatpush.bf16.msra.mxu0 0
    %646 = vmatpush.bf16.msra.mxu0 0
    %647 = vmatpush.bf16.msra.mxu0 0
    %648 = vmatpush.bf16.msra.mxu0 0
    %649 = vmatpush.bf16.msra.mxu0 0
    %650 = vmatpush.bf16.msra.mxu0 %v641
    %651 = vmatmul.bf16.gmra.mxu0 %v638
    %v652 = vpop.f32.mrf.mxu0
    %v653 = vadd.f32 0.0, %v652
    %v654 = vpop.f32.mrf.mxu0
    %v655 = vadd.f32 0.0, %v654
    %656 = vdwg.mxu0
    %v659 = vunpack.c.l.b16 %v598
    %v660 = vunpack.c.l.b16 %v599
    %v661 = vpack.c.b16 %v660, %v659
    %v663 = vsel %vm292, %v661, 0
    %v666 = vsel %vm614, %v604, 0
    %668 = vmatpush.bf16.msra.mxu0 0
    %669 = vmatpush.bf16.msra.mxu0 0
    %670 = vmatpush.bf16.msra.mxu0 0
    %671 = vmatpush.bf16.msra.mxu0 0
    %672 = vmatpush.bf16.msra.mxu0 0
    %673 = vmatpush.bf16.msra.mxu0 0
    %674 = vmatpush.bf16.msra.mxu0 0
    %675 = vmatpush.bf16.msra.mxu0 %v666
    %676 = vmatmul.bf16.gmra.mxu0 %v663
    %v677 = vpop.f32.mrf.mxu0
    %v678 = vadd.f32 0.0, %v677
    %v679 = vpop.f32.mrf.mxu0
    %v680 = vadd.f32 0.0, %v679
    %681 = vdwg.mxu0
    %v684 = vunpack.c.l.b16 %v600
    %v685 = vunpack.c.l.b16 %v601
    %v686 = vpack.c.b16 %v685, %v684
    %v688 = vsel %vm292, %v686, 0
    %v691 = vsel %vm614, %v605, 0
    %693 = vmatpush.bf16.msra.mxu0 0
    %694 = vmatpush.bf16.msra.mxu0 0
    %695 = vmatpush.bf16.msra.mxu0 0
    %696 = vmatpush.bf16.msra.mxu0 0
    %697 = vmatpush.bf16.msra.mxu0 0
    %698 = vmatpush.bf16.msra.mxu0 0
    %699 = vmatpush.bf16.msra.mxu0 0
    %700 = vmatpush.bf16.msra.mxu0 %v691
    %701 = vmatmul.bf16.gmra.mxu0 %v688
    %v702 = vpop.f32.mrf.mxu0
    %v703 = vadd.f32 0.0, %v702
    %v704 = vpop.f32.mrf.mxu0
    %v705 = vadd.f32 0.0, %v704
    %706 = vdwg.mxu0
    %v707 = vsel %vm232, %v628, 0.0
    %v708 = vsel %vm232, %v653, 0.0
    %v709 = vadd.f32 %v707, %v708
    %v710 = vsel %vm232, %v678, 0.0
    %v711 = vadd.f32 %v709, %v710
    %v712 = vsel %vm232, %v703, 0.0
    %v713 = vadd.f32 %v711, %v712
    %v714 = vsel %vm232, %v630, 0.0
    %v715 = vsel %vm232, %v655, 0.0
    %v716 = vadd.f32 %v714, %v715
    %v717 = vsel %vm232, %v680, 0.0
    %v718 = vadd.f32 %v716, %v717
    %v719 = vsel %vm232, %v705, 0.0
    %v720 = vadd.f32 %v718, %v719
    %v721 = vperm.slane %v152, 0
    %v722 = vadd.f32 %v713, %v721
    %v723 = vadd.f32 %v720, %v721
    %v724 = vadd.f32 %v146, %v722
    %v725 = vadd.f32 %v147, %v723
    %v726 = vsel %vm232, %v724, 0.0
    %727 = vadd.xlane.f32.xlu0 %v726
    %v728 = vpop.xlane.xlu0 %727
    %v729 = vsel %vm232, %v725, 0.0
    %730 = vadd.xlane.f32.xlu0 %v729
    %v731 = vpop.xlane.xlu0 %730
    %v732 = vrcp.pop 32.0
    %v733 = vmul.f32 32.0, %v732
    %v734 = vsub.f32 1.0, %v733
    %v735 = vmul.f32 %v732, %v734
    %v736 = vadd.f32 %v732, %v735
    %vm737 = vweird.f32 %v732
    %v738 = vsel %vm737, %v732, %v736
    %v739 = vmul.f32 %v728, %v738
    %v740 = vmul.f32 %v731, %v738
    %v741 = vsub.f32 %v724, %v739
    %v742 = vsub.f32 %v725, %v740
    %v743 = vmul.f32 %v741, %v741
    %v744 = vmul.f32 %v742, %v742
    %v745 = vsel %vm232, %v743, 0.0
    %746 = vadd.xlane.f32.xlu0 %v745
    %v747 = vpop.xlane.xlu0 %746
    %v748 = vsel %vm232, %v744, 0.0
    %749 = vadd.xlane.f32.xlu0 %v748
    %v750 = vpop.xlane.xlu0 %749
    %v751 = vmul.f32 %v747, %v738
    %v752 = vmul.f32 %v750, %v738
    %v753 = vadd.f32 %v751, 1e-05
    %v754 = vadd.f32 %v752, 1e-05
    %v755 = vrsqrt.pop %v753
    %v756 = vmul.f32 %v755, %v753
    %v757 = vmul.f32 %v756, %v755
    %v758 = vmul.f32 0.5, %v757
    %v759 = vsub.f32 1.5, %v758
    %v760 = vmul.f32 %v755, %v759
    %vm761 = vweird.f32 %v753
    %vm762 = vweird.f32 %v755
    %vm763 = vmor %vm761, %vm762
    %v764 = vsel %vm763, %v755, %v760
    %v765 = vrsqrt.pop %v754
    %v766 = vmul.f32 %v765, %v754
    %v767 = vmul.f32 %v766, %v765
    %v768 = vmul.f32 0.5, %v767
    %v769 = vsub.f32 1.5, %v768
    %v770 = vmul.f32 %v765, %v769
    %vm771 = vweird.f32 %v754
    %vm772 = vweird.f32 %v765
    %vm773 = vmor %vm771, %vm772
    %v774 = vsel %vm773, %v765, %v770
    %v775 = vmul.f32 %v741, %v764
    %v776 = vmul.f32 %v742, %v774
    %v777 = vperm.slane %v152, 4
    %v778 = vmul.f32 %v775, %v777
    %v779 = vmul.f32 %v776, %v777
    %v780 = vperm.slane %v152, 5
    %v781 = vadd.f32 %v778, %v780
    %v782 = vadd.f32 %v779, %v780
    %v783 = vpack.c.bf16 %v782, %v781
    %v784 = vld [vmem:[#allocation5] sm:$0xf]
    %v785 = vld [vmem:[#allocation5 + $0x4] sm:$0xf]
    %v786 = vld [vmem:[#allocation5 + $0x8] sm:$0xf]
    %v787 = vld [vmem:[#allocation5 + $0xc] sm:$0xf]
    %v788 = vperm.slane %v152, 1
    %v793 = vunpack.c.l.b16 %v784
    %v794 = vunpack.c.l.b16 %v785
    %v795 = vunpack.c.l.b16 %v786
    %v796 = vunpack.c.l.b16 %v787
    %v797 = vpack.c.b16 %v794, %v793
    %v798 = vpack.c.b16 %v796, %v795
    %v802 = vsel %vm232, %v783, 0
    %804 = vmatpush.bf16.msra.mxu0 0
    %805 = vmatpush.bf16.msra.mxu0 0
    %806 = vmatpush.bf16.msra.mxu0 0
    %807 = vmatpush.bf16.msra.mxu0 0
    %808 = vmatpush.bf16.msra.mxu0 0
    %809 = vmatpush.bf16.msra.mxu0 0
    %810 = vmatpush.bf16.msra.mxu0 %v798
    %811 = vmatpush.bf16.msra.mxu0 %v797
    %812 = vmatmul.bf16.gmra.mxu0 %v802
    %v813 = vpop.f32.mrf.mxu0
    %v814 = vadd.f32 %v788, %v813
    %v815 = vpop.f32.mrf.mxu0
    %v816 = vadd.f32 %v788, %v815
    %817 = vdwg.mxu0
    %v818 = vld [vmem:[#allocation7] sm:$0xf]
    %v819 = vld [vmem:[#allocation7 + $0x4] sm:$0xf]
    %v820 = vld [vmem:[#allocation7 + $0x8] sm:$0xf]
    %v821 = vld [vmem:[#allocation7 + $0xc] sm:$0xf]
    %v822 = vld [vmem:[%s8] sm:$0x1]
    %v824 = vperm.slane %v822, 0
    %v829 = vunpack.c.l.b16 %v148
    %v830 = vunpack.c.l.b16 %v149
    %v831 = vunpack.c.l.b16 %v150
    %v832 = vpack.c.b16 %v830, %v829
    %v833 = vpack.c.b16 %v831, %v831
    %v838 = vunpack.c.l.b16 %v818
    %v839 = vunpack.c.l.b16 %v819
    %v840 = vunpack.c.l.b16 %v820
    %v841 = vunpack.c.l.b16 %v821
    %v842 = vpack.c.b16 %v839, %v838
    %v843 = vpack.c.b16 %v841, %v840
    %v847 = vsel %vm232, %v832, 0
    %v850 = vsel %vm232, %v833, 0
    %852 = vmatpush.bf16.msra.mxu0 0
    %853 = vmatpush.bf16.msra.mxu0 0
    %854 = vmatpush.bf16.msra.mxu0 0
    %855 = vmatpush.bf16.msra.mxu0 0
    %856 = vmatpush.bf16.msra.mxu0 0
    %857 = vmatpush.bf16.msra.mxu0 0
    %858 = vmatpush.bf16.msra.mxu0 %v843
    %859 = vmatpush.bf16.msra.mxu0 %v842
    %860 = vmatmul.bf16.gmra.mxu0 %v847
    %v861 = vpop.f32.mrf.mxu0
    %v862 = vadd.f32 %v824, %v861
    %v863 = vpop.f32.mrf.mxu0
    %v864 = vadd.f32 %v824, %v863
    %865 = vmatmul.bf16.gmra.mxu0 %v850
    %v866 = vpop.f32.mrf.mxu0
    %v867 = vadd.f32 %v824, %v866
    %v868 = vpop.f32.mrf.mxu0
    %869 = vdwg.mxu0
    %v870 = vmul.f32 %v814, 0.35355338
    %v871 = vmul.f32 %v816, 0.35355338
    %v872 = vpack.c.bf16 %v870, %v870
    %v873 = vpack.c.bf16 %v871, %v871
    %876 = vrot.lane.b32.xlu0 %v872, 120
    %v877 = vpop.permute.xlu0 %876
    %878 = vrot.lane.b32.xlu0 %v873, 120
    %v879 = vpop.permute.xlu0 %878
    %880 = vrot.lane.b32.xlu0 %v872, 112
    %v881 = vpop.permute.xlu0 %880
    %882 = vrot.lane.b32.xlu0 %v873, 112
    %v883 = vpop.permute.xlu0 %882
    %884 = vrot.lane.b32.xlu0 %v872, 104
    %v885 = vpop.permute.xlu0 %884
    %886 = vrot.lane.b32.xlu0 %v873, 104
    %v887 = vpop.permute.xlu0 %886
    %v888 = vpack.c.bf16 %v862, %v862
    %v889 = vpack.c.bf16 %v864, %v864
    %v890 = vpack.c.bf16 %v867, %v867
    %894 = vrot.lane.b32.xlu0 %v888, 120
    %v895 = vpop.permute.xlu0 %894
    %896 = vrot.lane.b32.xlu0 %v889, 120
    %v897 = vpop.permute.xlu0 %896
    %898 = vrot.lane.b32.xlu0 %v890, 120
    %v899 = vpop.permute.xlu0 %898
    %900 = vrot.lane.b32.xlu0 %v888, 112
    %v901 = vpop.permute.xlu0 %900
    %902 = vrot.lane.b32.xlu0 %v889, 112
    %v903 = vpop.permute.xlu0 %902
    %904 = vrot.lane.b32.xlu0 %v890, 112
    %v905 = vpop.permute.xlu0 %904
    %906 = vrot.lane.b32.xlu0 %v888, 104
    %v907 = vpop.permute.xlu0 %906
    %908 = vrot.lane.b32.xlu0 %v889, 104
    %v909 = vpop.permute.xlu0 %908
    %910 = vrot.lane.b32.xlu0 %v890, 104
    %v911 = vpop.permute.xlu0 %910
    %v912 = vunpack.c.l.b16 %v872
    %v913 = vunpack.c.l.b16 %v873
    %v914 = vpack.c.b16 %v913, %v912
    %v915 = vunpack.c.l.b16 %v888
    %v916 = vunpack.c.l.b16 %v889
    %v917 = vunpack.c.l.b16 %v890
    %v918 = vpack.c.b16 %v916, %v915
    %v919 = vpack.c.b16 %v917, %v917
    %v921 = vsel %vm292, %v914, 0
    %v924 = vsel %vm292, %v918, 0
    %v927 = vsel %vm292, %v919, 0
    %929 = vmatpush.bf16.xpose.msra.mxu0 0
    %930 = vmatpush.bf16.xpose.msra.mxu0 0
    %931 = vmatpush.bf16.xpose.msra.mxu0 0
    %932 = vmatpush.bf16.xpose.msra.mxu0 0
    %933 = vmatpush.bf16.xpose.msra.mxu0 0
    %934 = vmatpush.bf16.xpose.msra.mxu0 0
    %935 = vmatpush.bf16.xpose.msra.mxu0 %v927
    %936 = vmatpush.bf16.xpose.msra.mxu0 %v924
    %937 = vmatmul.bf16.gmra.mxu0 %v921
    %v938 = vpop.f32.mrf.mxu0
    %v939 = vadd.f32 %v209, %v938
    %v940 = vpop.f32.mrf.mxu0
    %v941 = vadd.f32 %v210, %v940
    %942 = vdwg.mxu0
    %v943 = vunpack.c.l.b16 %v877
    %v944 = vunpack.c.l.b16 %v879
    %v945 = vpack.c.b16 %v944, %v943
    %v946 = vunpack.c.l.b16 %v895
    %v947 = vunpack.c.l.b16 %v897
    %v948 = vunpack.c.l.b16 %v899
    %v949 = vpack.c.b16 %v947, %v946
    %v950 = vpack.c.b16 %v948, %v948
    %v952 = vsel %vm292, %v945, 0
    %v955 = vsel %vm292, %v949, 0
    %v958 = vsel %vm292, %v950, 0
    %960 = vmatpush.bf16.xpose.msra.mxu0 0
    %961 = vmatpush.bf16.xpose.msra.mxu0 0
    %962 = vmatpush.bf16.xpose.msra.mxu0 0
    %963 = vmatpush.bf16.xpose.msra.mxu0 0
    %964 = vmatpush.bf16.xpose.msra.mxu0 0
    %965 = vmatpush.bf16.xpose.msra.mxu0 0
    %966 = vmatpush.bf16.xpose.msra.mxu0 %v958
    %967 = vmatpush.bf16.xpose.msra.mxu0 %v955
    %968 = vmatmul.bf16.gmra.mxu0 %v952
    %v969 = vpop.f32.mrf.mxu0
    %v970 = vadd.f32 %v209, %v969
    %v971 = vpop.f32.mrf.mxu0
    %v972 = vadd.f32 %v210, %v971
    %973 = vdwg.mxu0
    %v974 = vunpack.c.l.b16 %v881
    %v975 = vunpack.c.l.b16 %v883
    %v976 = vpack.c.b16 %v975, %v974
    %v977 = vunpack.c.l.b16 %v901
    %v978 = vunpack.c.l.b16 %v903
    %v979 = vunpack.c.l.b16 %v905
    %v980 = vpack.c.b16 %v978, %v977
    %v981 = vpack.c.b16 %v979, %v979
    %v983 = vsel %vm292, %v976, 0
    %v986 = vsel %vm292, %v980, 0
    %v989 = vsel %vm292, %v981, 0
    %991 = vmatpush.bf16.xpose.msra.mxu0 0
    %992 = vmatpush.bf16.xpose.msra.mxu0 0
    %993 = vmatpush.bf16.xpose.msra.mxu0 0
    %994 = vmatpush.bf16.xpose.msra.mxu0 0
    %995 = vmatpush.bf16.xpose.msra.mxu0 0
    %996 = vmatpush.bf16.xpose.msra.mxu0 0
    %997 = vmatpush.bf16.xpose.msra.mxu0 %v989
    %998 = vmatpush.bf16.xpose.msra.mxu0 %v986
    %999 = vmatmul.bf16.gmra.mxu0 %v983
    %v1000 = vpop.f32.mrf.mxu0
    %v1001 = vadd.f32 %v209, %v1000
    %v1002 = vpop.f32.mrf.mxu0
    %v1003 = vadd.f32 %v210, %v1002
    %1004 = vdwg.mxu0
    %v1005 = vunpack.c.l.b16 %v885
    %v1006 = vunpack.c.l.b16 %v887
    %v1007 = vpack.c.b16 %v1006, %v1005
    %v1008 = vunpack.c.l.b16 %v907
    %v1009 = vunpack.c.l.b16 %v909
    %v1010 = vunpack.c.l.b16 %v911
    %v1011 = vpack.c.b16 %v1009, %v1008
    %v1012 = vpack.c.b16 %v1010, %v1010
    %v1014 = vsel %vm292, %v1007, 0
    %v1017 = vsel %vm292, %v1011, 0
    %v1020 = vsel %vm292, %v1012, 0
    %1022 = vmatpush.bf16.xpose.msra.mxu0 0
    %1023 = vmatpush.bf16.xpose.msra.mxu0 0
    %1024 = vmatpush.bf16.xpose.msra.mxu0 0
    %1025 = vmatpush.bf16.xpose.msra.mxu0 0
    %1026 = vmatpush.bf16.xpose.msra.mxu0 0
    %1027 = vmatpush.bf16.xpose.msra.mxu0 0
    %1028 = vmatpush.bf16.xpose.msra.mxu0 %v1020
    %1029 = vmatpush.bf16.xpose.msra.mxu0 %v1017
    %1030 = vmatmul.bf16.gmra.mxu0 %v1014
    %v1031 = vpop.f32.mrf.mxu0
    %v1032 = vadd.f32 %v209, %v1031
    %v1033 = vpop.f32.mrf.mxu0
    %v1034 = vadd.f32 %v210, %v1033
    %1035 = vdwg.mxu0
    %vm1036 = vcmask 195584
    %v1037 = vsel %vm1036, %v939, -inf
    %1038 = vmax.xlane.f32.xlu0 %v1037
    %v1039 = vpop.xlane.xlu0 %1038
    %v1040 = vsel %vm1036, %v941, -inf
    %1041 = vmax.xlane.f32.xlu0 %v1040
    %v1042 = vpop.xlane.xlu0 %1041
    %v1043 = vsel %vm1036, %v970, -inf
    %1044 = vmax.xlane.f32.xlu0 %v1043
    %v1045 = vpop.xlane.xlu0 %1044
    %v1046 = vsel %vm1036, %v972, -inf
    %1047 = vmax.xlane.f32.xlu0 %v1046
    %v1048 = vpop.xlane.xlu0 %1047
    %v1049 = vsel %vm1036, %v1001, -inf
    %1050 = vmax.xlane.f32.xlu0 %v1049
    %v1051 = vpop.xlane.xlu0 %1050
    %v1052 = vsel %vm1036, %v1003, -inf
    %1053 = vmax.xlane.f32.xlu0 %v1052
    %v1054 = vpop.xlane.xlu0 %1053
    %v1055 = vsel %vm1036, %v1032, -inf
    %1056 = vmax.xlane.f32.xlu0 %v1055
    %v1057 = vpop.xlane.xlu0 %1056
    %v1058 = vsel %vm1036, %v1034, -inf
    %1059 = vmax.xlane.f32.xlu0 %v1058
    %v1060 = vpop.xlane.xlu0 %1059
    %v1061 = vsub.f32 %v939, %v1039
    %v1062 = vsub.f32 %v941, %v1042
    %v1063 = vsub.f32 %v970, %v1045
    %v1064 = vsub.f32 %v972, %v1048
    %v1065 = vsub.f32 %v1001, %v1051
    %v1066 = vsub.f32 %v1003, %v1054
    %v1067 = vsub.f32 %v1032, %v1057
    %v1068 = vsub.f32 %v1034, %v1060
    %v1069 = vmul.f32 %v1061, 1.442695
    %v1070 = vpow.pop %v1069
    %v1071 = vmul.f32 %v1062, 1.442695
    %v1072 = vpow.pop %v1071
    %v1073 = vmul.f32 %v1063, 1.442695
    %v1074 = vpow.pop %v1073
    %v1075 = vmul.f32 %v1064, 1.442695
    %v1076 = vpow.pop %v1075
    %v1077 = vmul.f32 %v1065, 1.442695
    %v1078 = vpow.pop %v1077
    %v1079 = vmul.f32 %v1066, 1.442695
    %v1080 = vpow.pop %v1079
    %v1081 = vmul.f32 %v1067, 1.442695
    %v1082 = vpow.pop %v1081
    %v1083 = vmul.f32 %v1068, 1.442695
    %v1084 = vpow.pop %v1083
    %v1085 = vsel %vm1036, %v1070, 0.0
    %1086 = vadd.xlane.f32.xlu0 %v1085
    %v1087 = vpop.xlane.xlu0 %1086
    %v1088 = vsel %vm1036, %v1072, 0.0
    %1089 = vadd.xlane.f32.xlu0 %v1088
    %v1090 = vpop.xlane.xlu0 %1089
    %v1091 = vsel %vm1036, %v1074, 0.0
    %1092 = vadd.xlane.f32.xlu0 %v1091
    %v1093 = vpop.xlane.xlu0 %1092
    %v1094 = vsel %vm1036, %v1076, 0.0
    %1095 = vadd.xlane.f32.xlu0 %v1094
    %v1096 = vpop.xlane.xlu0 %1095
    %v1097 = vsel %vm1036, %v1078, 0.0
    %1098 = vadd.xlane.f32.xlu0 %v1097
    %v1099 = vpop.xlane.xlu0 %1098
    %v1100 = vsel %vm1036, %v1080, 0.0
    %1101 = vadd.xlane.f32.xlu0 %v1100
    %v1102 = vpop.xlane.xlu0 %1101
    %v1103 = vsel %vm1036, %v1082, 0.0
    %1104 = vadd.xlane.f32.xlu0 %v1103
    %v1105 = vpop.xlane.xlu0 %1104
    %v1106 = vsel %vm1036, %v1084, 0.0
    %1107 = vadd.xlane.f32.xlu0 %v1106
    %v1108 = vpop.xlane.xlu0 %1107
    %v1109 = vrcp.pop %v1087
    %v1110 = vrcp.pop %v1090
    %v1111 = vrcp.pop %v1093
    %v1112 = vrcp.pop %v1096
    %v1113 = vrcp.pop %v1099
    %v1114 = vrcp.pop %v1102
    %v1115 = vrcp.pop %v1105
    %v1116 = vrcp.pop %v1108
    %v1117 = vmul.f32 %v1070, %v1109
    %v1118 = vmul.f32 %v1072, %v1110
    %v1119 = vmul.f32 %v1074, %v1111
    %v1120 = vmul.f32 %v1076, %v1112
    %v1121 = vmul.f32 %v1078, %v1113
    %v1122 = vmul.f32 %v1080, %v1114
    %v1123 = vmul.f32 %v1082, %v1115
    %v1124 = vmul.f32 %v1084, %v1116
    %v1125 = vpack.c.bf16 %v1117, %v1117
    %v1126 = vpack.c.bf16 %v1118, %v1118
    %v1127 = vpack.c.bf16 %v1119, %v1119
    %v1128 = vpack.c.bf16 %v1120, %v1120
    %v1129 = vpack.c.bf16 %v1121, %v1121
    %v1130 = vpack.c.bf16 %v1122, %v1122
    %v1131 = vpack.c.bf16 %v1123, %v1123
    %v1132 = vpack.c.bf16 %v1124, %v1124
    %v1135 = vunpack.c.l.b16 %v1125
    %v1136 = vunpack.c.l.b16 %v1126
    %v1137 = vpack.c.b16 %v1136, %v1135
    %1138 = vrot.lane.b32.xlu0 %v918, 96
    %v1139 = vpop.permute.xlu0 %1138
    %1140 = vrot.lane.b32.xlu0 %v919, 96
    %v1141 = vpop.permute.xlu0 %1140
    %v1144 = vsel %vm1036, %v1137, 0
    %v1147 = vsel %vm614, %v1141, 0
    %1149 = vmatpush.bf16.msra.mxu0 0
    %1150 = vmatpush.bf16.msra.mxu0 0
    %1151 = vmatpush.bf16.msra.mxu0 0
    %1152 = vmatpush.bf16.msra.mxu0 0
    %1153 = vmatpush.bf16.msra.mxu0 0
    %1154 = vmatpush.bf16.msra.mxu0 0
    %1155 = vmatpush.bf16.msra.mxu0 %v1147
    %1156 = vmatpush.bf16.msra.mxu0 %v1139
    %1157 = vmatmul.bf16.gmra.mxu0 %v1144
    %v1158 = vpop.f32.mrf.mxu0
    %v1159 = vadd.f32 0.0, %v1158
    %v1160 = vpop.f32.mrf.mxu0
    %v1161 = vadd.f32 0.0, %v1160
    %1162 = vdwg.mxu0
    %v1165 = vunpack.c.l.b16 %v1127
    %v1166 = vunpack.c.l.b16 %v1128
    %v1167 = vpack.c.b16 %v1166, %v1165
    %1168 = vrot.lane.b32.xlu0 %v949, 96
    %v1169 = vpop.permute.xlu0 %1168
    %1170 = vrot.lane.b32.xlu0 %v950, 96
    %v1171 = vpop.permute.xlu0 %1170
    %v1174 = vsel %vm1036, %v1167, 0
    %v1177 = vsel %vm614, %v1171, 0
    %1179 = vmatpush.bf16.msra.mxu0 0
    %1180 = vmatpush.bf16.msra.mxu0 0
    %1181 = vmatpush.bf16.msra.mxu0 0
    %1182 = vmatpush.bf16.msra.mxu0 0
    %1183 = vmatpush.bf16.msra.mxu0 0
    %1184 = vmatpush.bf16.msra.mxu0 0
    %1185 = vmatpush.bf16.msra.mxu0 %v1177
    %1186 = vmatpush.bf16.msra.mxu0 %v1169
    %1187 = vmatmul.bf16.gmra.mxu0 %v1174
    %v1188 = vpop.f32.mrf.mxu0
    %v1189 = vadd.f32 0.0, %v1188
    %v1190 = vpop.f32.mrf.mxu0
    %v1191 = vadd.f32 0.0, %v1190
    %1192 = vdwg.mxu0
    %v1195 = vunpack.c.l.b16 %v1129
    %v1196 = vunpack.c.l.b16 %v1130
    %v1197 = vpack.c.b16 %v1196, %v1195
    %1198 = vrot.lane.b32.xlu0 %v980, 96
    %v1199 = vpop.permute.xlu0 %1198
    %1200 = vrot.lane.b32.xlu0 %v981, 96
    %v1201 = vpop.permute.xlu0 %1200
    %v1204 = vsel %vm1036, %v1197, 0
    %v1207 = vsel %vm614, %v1201, 0
    %1209 = vmatpush.bf16.msra.mxu0 0
    %1210 = vmatpush.bf16.msra.mxu0 0
    %1211 = vmatpush.bf16.msra.mxu0 0
    %1212 = vmatpush.bf16.msra.mxu0 0
    %1213 = vmatpush.bf16.msra.mxu0 0
    %1214 = vmatpush.bf16.msra.mxu0 0
    %1215 = vmatpush.bf16.msra.mxu0 %v1207
    %1216 = vmatpush.bf16.msra.mxu0 %v1199
    %1217 = vmatmul.bf16.gmra.mxu0 %v1204
    %v1218 = vpop.f32.mrf.mxu0
    %v1219 = vadd.f32 0.0, %v1218
    %v1220 = vpop.f32.mrf.mxu0
    %v1221 = vadd.f32 0.0, %v1220
    %1222 = vdwg.mxu0
    %v1225 = vunpack.c.l.b16 %v1131
    %v1226 = vunpack.c.l.b16 %v1132
    %v1227 = vpack.c.b16 %v1226, %v1225
    %1228 = vrot.lane.b32.xlu0 %v1011, 96
    %v1229 = vpop.permute.xlu0 %1228
    %1230 = vrot.lane.b32.xlu0 %v1012, 96
    %v1231 = vpop.permute.xlu0 %1230
    %v1234 = vsel %vm1036, %v1227, 0
    %v1237 = vsel %vm614, %v1231, 0
    %1239 = vmatpush.bf16.msra.mxu0 0
    %1240 = vmatpush.bf16.msra.mxu0 0
    %1241 = vmatpush.bf16.msra.mxu0 0
    %1242 = vmatpush.bf16.msra.mxu0 0
    %1243 = vmatpush.bf16.msra.mxu0 0
    %1244 = vmatpush.bf16.msra.mxu0 0
    %1245 = vmatpush.bf16.msra.mxu0 %v1237
    %1246 = vmatpush.bf16.msra.mxu0 %v1229
    %1247 = vmatmul.bf16.gmra.mxu0 %v1234
    %v1248 = vpop.f32.mrf.mxu0
    %v1249 = vadd.f32 0.0, %v1248
    %v1250 = vpop.f32.mrf.mxu0
    %v1251 = vadd.f32 0.0, %v1250
    %1252 = vdwg.mxu0
    %v1253 = vpack.c.bf16 %v1159, %v1159
    %v1254 = vpack.c.bf16 %v1161, %v1161
    %v1255 = vpack.c.bf16 %v1189, %v1189
    %v1256 = vpack.c.bf16 %v1191, %v1191
    %v1257 = vpack.c.bf16 %v1219, %v1219
    %v1258 = vpack.c.bf16 %v1221, %v1221
    %v1259 = vpack.c.bf16 %v1249, %v1249
    %v1260 = vpack.c.bf16 %v1251, %v1251
    %v1261 = vld [vmem:[#allocation8] sm:$0xf]
    %v1262 = vld [vmem:[#allocation8 + $0x4] sm:$0xf]
    %v1263 = vld [vmem:[#allocation8 + $0x8] sm:$0xf]
    %v1264 = vld [vmem:[#allocation8 + $0xc] sm:$0xf]
    %v1267 = vunpack.c.l.b16 %v1253
    %v1268 = vunpack.c.l.b16 %v1254
    %v1269 = vpack.c.b16 %v1268, %v1267
    %v1271 = vsel %vm292, %v1269, 0
    %v1274 = vsel %vm614, %v1261, 0
    %1276 = vmatpush.bf16.msra.mxu0 0
    %1277 = vmatpush.bf16.msra.mxu0 0
    %1278 = vmatpush.bf16.msra.mxu0 0
    %1279 = vmatpush.bf16.msra.mxu0 0
    %1280 = vmatpush.bf16.msra.mxu0 0
    %1281 = vmatpush.bf16.msra.mxu0 0
    %1282 = vmatpush.bf16.msra.mxu0 0
    %1283 = vmatpush.bf16.msra.mxu0 %v1274
    %1284 = vmatmul.bf16.gmra.mxu0 %v1271
    %v1285 = vpop.f32.mrf.mxu0
    %v1286 = vadd.f32 0.0, %v1285
    %v1287 = vpop.f32.mrf.mxu0
    %v1288 = vadd.f32 0.0, %v1287
    %1289 = vdwg.mxu0
    %v1292 = vunpack.c.l.b16 %v1255
    %v1293 = vunpack.c.l.b16 %v1256
    %v1294 = vpack.c.b16 %v1293, %v1292
    %v1296 = vsel %vm292, %v1294, 0
    %v1299 = vsel %vm614, %v1262, 0
    %1301 = vmatpush.bf16.msra.mxu0 0
    %1302 = vmatpush.bf16.msra.mxu0 0
    %1303 = vmatpush.bf16.msra.mxu0 0
    %1304 = vmatpush.bf16.msra.mxu0 0
    %1305 = vmatpush.bf16.msra.mxu0 0
    %1306 = vmatpush.bf16.msra.mxu0 0
    %1307 = vmatpush.bf16.msra.mxu0 0
    %1308 = vmatpush.bf16.msra.mxu0 %v1299
    %1309 = vmatmul.bf16.gmra.mxu0 %v1296
    %v1310 = vpop.f32.mrf.mxu0
    %v1311 = vadd.f32 0.0, %v1310
    %v1312 = vpop.f32.mrf.mxu0
    %v1313 = vadd.f32 0.0, %v1312
    %1314 = vdwg.mxu0
    %v1317 = vunpack.c.l.b16 %v1257
    %v1318 = vunpack.c.l.b16 %v1258
    %v1319 = vpack.c.b16 %v1318, %v1317
    %v1321 = vsel %vm292, %v1319, 0
    %v1324 = vsel %vm614, %v1263, 0
    %1326 = vmatpush.bf16.msra.mxu0 0
    %1327 = vmatpush.bf16.msra.mxu0 0
    %1328 = vmatpush.bf16.msra.mxu0 0
    %1329 = vmatpush.bf16.msra.mxu0 0
    %1330 = vmatpush.bf16.msra.mxu0 0
    %1331 = vmatpush.bf16.msra.mxu0 0
    %1332 = vmatpush.bf16.msra.mxu0 0
    %1333 = vmatpush.bf16.msra.mxu0 %v1324
    %1334 = vmatmul.bf16.gmra.mxu0 %v1321
    %v1335 = vpop.f32.mrf.mxu0
    %v1336 = vadd.f32 0.0, %v1335
    %v1337 = vpop.f32.mrf.mxu0
    %v1338 = vadd.f32 0.0, %v1337
    %1339 = vdwg.mxu0
    %v1342 = vunpack.c.l.b16 %v1259
    %v1343 = vunpack.c.l.b16 %v1260
    %v1344 = vpack.c.b16 %v1343, %v1342
    %v1346 = vsel %vm292, %v1344, 0
    %v1349 = vsel %vm614, %v1264, 0
    %1351 = vmatpush.bf16.msra.mxu0 0
    %1352 = vmatpush.bf16.msra.mxu0 0
    %1353 = vmatpush.bf16.msra.mxu0 0
    %1354 = vmatpush.bf16.msra.mxu0 0
    %1355 = vmatpush.bf16.msra.mxu0 0
    %1356 = vmatpush.bf16.msra.mxu0 0
    %1357 = vmatpush.bf16.msra.mxu0 0
    %1358 = vmatpush.bf16.msra.mxu0 %v1349
    %1359 = vmatmul.bf16.gmra.mxu0 %v1346
    %v1360 = vpop.f32.mrf.mxu0
    %v1361 = vadd.f32 0.0, %v1360
    %v1362 = vpop.f32.mrf.mxu0
    %v1363 = vadd.f32 0.0, %v1362
    %1364 = vdwg.mxu0
    %v1365 = vsel %vm232, %v1286, 0.0
    %v1366 = vsel %vm232, %v1311, 0.0
    %v1367 = vadd.f32 %v1365, %v1366
    %v1368 = vsel %vm232, %v1336, 0.0
    %v1369 = vadd.f32 %v1367, %v1368
    %v1370 = vsel %vm232, %v1361, 0.0
    %v1371 = vadd.f32 %v1369, %v1370
    %v1372 = vsel %vm232, %v1288, 0.0
    %v1373 = vsel %vm232, %v1313, 0.0
    %v1374 = vadd.f32 %v1372, %v1373
    %v1375 = vsel %vm232, %v1338, 0.0
    %v1376 = vadd.f32 %v1374, %v1375
    %v1377 = vsel %vm232, %v1363, 0.0
    %v1378 = vadd.f32 %v1376, %v1377
    %v1379 = vperm.slane %v152, 2
    %v1380 = vadd.f32 %v1371, %v1379
    %v1381 = vadd.f32 %v1378, %v1379
    %v1382 = vsel %vm1036, %v1117, 0.0
    %v1383 = vsel %vm1036, %v1119, 0.0
    %v1384 = vadd.f32 %v1382, %v1383
    %v1385 = vsel %vm1036, %v1121, 0.0
    %v1386 = vadd.f32 %v1384, %v1385
    %v1387 = vsel %vm1036, %v1123, 0.0
    %v1388 = vadd.f32 %v1386, %v1387
    %v1389 = vsel %vm1036, %v1118, 0.0
    %v1390 = vsel %vm1036, %v1120, 0.0
    %v1391 = vadd.f32 %v1389, %v1390
    %v1392 = vsel %vm1036, %v1122, 0.0
    %v1393 = vadd.f32 %v1391, %v1392
    %v1394 = vsel %vm1036, %v1124, 0.0
    %v1395 = vadd.f32 %v1393, %v1394
    %v1396 = vrcp.pop 4.0
    %v1397 = vmul.f32 4.0, %v1396
    %v1398 = vsub.f32 1.0, %v1397
    %v1399 = vmul.f32 %v1396, %v1398
    %v1400 = vadd.f32 %v1396, %v1399
    %vm1401 = vweird.f32 %v1396
    %v1402 = vsel %vm1401, %v1396, %v1400
    %v1403 = vmul.f32 %v1388, %v1402
    %v1404 = vmul.f32 %v1395, %v1402
    %v1405 = vadd.f32 %v781, %v1380
    %v1406 = vadd.f32 %v782, %v1381
    %v1407 = vsel %vm232, %v1405, 0.0
    %1408 = vadd.xlane.f32.xlu0 %v1407
    %v1409 = vpop.xlane.xlu0 %1408
    %v1410 = vsel %vm232, %v1406, 0.0
    %1411 = vadd.xlane.f32.xlu0 %v1410
    %v1412 = vpop.xlane.xlu0 %1411
    %v1413 = vmul.f32 %v1409, %v738
    %v1414 = vmul.f32 %v1412, %v738
    %v1415 = vsub.f32 %v1405, %v1413
    %v1416 = vsub.f32 %v1406, %v1414
    %v1417 = vmul.f32 %v1415, %v1415
    %v1418 = vmul.f32 %v1416, %v1416
    %v1419 = vsel %vm232, %v1417, 0.0
    %1420 = vadd.xlane.f32.xlu0 %v1419
    %v1421 = vpop.xlane.xlu0 %1420
    %v1422 = vsel %vm232, %v1418, 0.0
    %1423 = vadd.xlane.f32.xlu0 %v1422
    %v1424 = vpop.xlane.xlu0 %1423
    %v1425 = vmul.f32 %v1421, %v738
    %v1426 = vmul.f32 %v1424, %v738
    %v1427 = vadd.f32 %v1425, 1e-05
    %v1428 = vadd.f32 %v1426, 1e-05
    %v1429 = vrsqrt.pop %v1427
    %v1430 = vmul.f32 %v1429, %v1427
    %v1431 = vmul.f32 %v1430, %v1429
    %v1432 = vmul.f32 0.5, %v1431
    %v1433 = vsub.f32 1.5, %v1432
    %v1434 = vmul.f32 %v1429, %v1433
    %vm1435 = vweird.f32 %v1427
    %vm1436 = vweird.f32 %v1429
    %vm1437 = vmor %vm1435, %vm1436
    %v1438 = vsel %vm1437, %v1429, %v1434
    %v1439 = vrsqrt.pop %v1428
    %v1440 = vmul.f32 %v1439, %v1428
    %v1441 = vmul.f32 %v1440, %v1439
    %v1442 = vmul.f32 0.5, %v1441
    %v1443 = vsub.f32 1.5, %v1442
    %v1444 = vmul.f32 %v1439, %v1443
    %vm1445 = vweird.f32 %v1428
    %vm1446 = vweird.f32 %v1439
    %vm1447 = vmor %vm1445, %vm1446
    %v1448 = vsel %vm1447, %v1439, %v1444
    %v1449 = vmul.f32 %v1415, %v1438
    %v1450 = vmul.f32 %v1416, %v1448
    %v1451 = vperm.slane %v152, 6
    %v1452 = vmul.f32 %v1449, %v1451
    %v1453 = vmul.f32 %v1450, %v1451
    %v1454 = vperm.slane %v152, 7
    %v1455 = vadd.f32 %v1452, %v1454
    %v1456 = vadd.f32 %v1453, %v1454
    %v1457 = vpack.c.bf16 %v1456, %v1455
    %v1458 = vld [vmem:[#allocation10] sm:$0xf]
    %v1459 = vld [vmem:[#allocation10 + $0x4] sm:$0xf]
    %v1460 = vld [vmem:[#allocation10 + $0x8] sm:$0xf]
    %v1461 = vld [vmem:[#allocation10 + $0xc] sm:$0xf]
    %v1462 = vld [vmem:[%s11] sm:$0x1]
    %v1464 = vperm.slane %v1462, 0
    %v1470 = vunpack.c.l.b16 %v1458
    %v1471 = vunpack.c.l.b16 %v1459
    %v1472 = vunpack.c.l.b16 %v1460
    %v1473 = vunpack.c.l.b16 %v1461
    %v1474 = vpack.c.b16 %v1471, %v1470
    %v1475 = vpack.c.b16 %v1473, %v1472
    %v1479 = vsel %vm232, %v1457, 0
    %1481 = vmatpush.bf16.msra.mxu0 0
    %1482 = vmatpush.bf16.msra.mxu0 0
    %1483 = vmatpush.bf16.msra.mxu0 0
    %1484 = vmatpush.bf16.msra.mxu0 0
    %1485 = vmatpush.bf16.msra.mxu0 0
    %1486 = vmatpush.bf16.msra.mxu0 0
    %1487 = vmatpush.bf16.msra.mxu0 %v1475
    %1488 = vmatpush.bf16.msra.mxu0 %v1474
    %1489 = vmatmul.bf16.gmra.mxu0 %v1479
    %v1490 = vpop.f32.mrf.mxu0
    %v1491 = vadd.f32 %v1464, %v1490
    %v1492 = vpop.f32.mrf.mxu0
    %v1493 = vadd.f32 %v1464, %v1492
    %1494 = vdwg.mxu0
    %v1495 = vmax.f32 %v1491, 0.0
    %v1496 = vmax.f32 %v1493, 0.0
    %v1497 = vpack.c.bf16 %v1496, %v1495
    %v1498 = vld [vmem:[%s12] sm:$0xf]
    %v1499 = vld [vmem:[%s12 + $0x4] sm:$0xf]
    %v1500 = vld [vmem:[%s12 + $0x8] sm:$0xf]
    %v1501 = vld [vmem:[%s12 + $0xc] sm:$0xf]
    %v1502 = vld [vmem:[%s12 + $0x10] sm:$0xf]
    %v1503 = vld [vmem:[%s12 + $0x14] sm:$0xf]
    %v1504 = vld [vmem:[%s12 + $0x18] sm:$0xf]
    %v1505 = vld [vmem:[%s12 + $0x1c] sm:$0xf]
    %v1506 = vperm.slane %v152, 3
    %v1515 = vunpack.c.l.b16 %v1498
    %v1516 = vunpack.c.l.b16 %v1499
    %v1517 = vunpack.c.l.b16 %v1500
    %v1518 = vunpack.c.l.b16 %v1501
    %v1519 = vunpack.c.l.b16 %v1502
    %v1520 = vunpack.c.l.b16 %v1503
    %v1521 = vunpack.c.l.b16 %v1504
    %v1522 = vunpack.c.l.b16 %v1505
    %v1523 = vpack.c.b16 %v1516, %v1515
    %v1524 = vpack.c.b16 %v1518, %v1517
    %v1525 = vpack.c.b16 %v1520, %v1519
    %v1526 = vpack.c.b16 %v1522, %v1521
    %vm1531 = vcmask 523264
    %v1533 = vsel %vm1531, %v1497, 0
    %1535 = vmatpush.bf16.msra.mxu0 0
    %1536 = vmatpush.bf16.msra.mxu0 0
    %1537 = vmatpush.bf16.msra.mxu0 0
    %1538 = vmatpush.bf16.msra.mxu0 0
    %1539 = vmatpush.bf16.msra.mxu0 %v1526
    %1540 = vmatpush.bf16.msra.mxu0 %v1525
    %1541 = vmatpush.bf16.msra.mxu0 %v1524
    %1542 = vmatpush.bf16.msra.mxu0 %v1523
    %1543 = vmatmul.bf16.gmra.mxu0 %v1533
    %v1544 = vpop.f32.mrf.mxu0
    %v1545 = vadd.f32 %v1506, %v1544
    %v1546 = vpop.f32.mrf.mxu0
    %v1547 = vadd.f32 %v1506, %v1546
    %1548 = vdwg.mxu0
    %v1549 = vadd.f32 %v1455, %v1545
    %v1550 = vadd.f32 %v1456, %v1547
    %v1551 = vsel %vm232, %v1549, 0.0
    %1552 = vadd.xlane.f32.xlu0 %v1551
    %v1553 = vpop.xlane.xlu0 %1552
    %v1554 = vsel %vm232, %v1550, 0.0
    %1555 = vadd.xlane.f32.xlu0 %v1554
    %v1556 = vpop.xlane.xlu0 %1555
    %v1557 = vmul.f32 %v1553, %v738
    %v1558 = vmul.f32 %v1556, %v738
    %v1559 = vsub.f32 %v1549, %v1557
    %v1560 = vsub.f32 %v1550, %v1558
    %v1561 = vmul.f32 %v1559, %v1559
    %v1562 = vmul.f32 %v1560, %v1560
    %v1563 = vsel %vm232, %v1561, 0.0
    %1564 = vadd.xlane.f32.xlu0 %v1563
    %v1565 = vpop.xlane.xlu0 %1564
    %v1566 = vsel %vm232, %v1562, 0.0
    %1567 = vadd.xlane.f32.xlu0 %v1566
    %v1568 = vpop.xlane.xlu0 %1567
    %v1569 = vmul.f32 %v1565, %v738
    %v1570 = vmul.f32 %v1568, %v738
    %v1571 = vadd.f32 %v1569, 1e-05
    %v1572 = vadd.f32 %v1570, 1e-05
    %v1573 = vrsqrt.pop %v1571
    %v1574 = vmul.f32 %v1573, %v1571
    %v1575 = vmul.f32 %v1574, %v1573
    %v1576 = vmul.f32 0.5, %v1575
    %v1577 = vsub.f32 1.5, %v1576
    %v1578 = vmul.f32 %v1573, %v1577
    %vm1579 = vweird.f32 %v1571
    %vm1580 = vweird.f32 %v1573
    %vm1581 = vmor %vm1579, %vm1580
    %v1582 = vsel %vm1581, %v1573, %v1578
    %v1583 = vrsqrt.pop %v1572
    %v1584 = vmul.f32 %v1583, %v1572
    %v1585 = vmul.f32 %v1584, %v1583
    %v1586 = vmul.f32 0.5, %v1585
    %v1587 = vsub.f32 1.5, %v1586
    %v1588 = vmul.f32 %v1583, %v1587
    %vm1589 = vweird.f32 %v1572
    %vm1590 = vweird.f32 %v1583
    %vm1591 = vmor %vm1589, %vm1590
    %v1592 = vsel %vm1591, %v1583, %v1588
    %v1593 = vmul.f32 %v1559, %v1582
    %v1594 = vmul.f32 %v1560, %v1592
    %v1595 = vperm.slane %v153, 0
    %v1596 = vmul.f32 %v1593, %v1595
    %v1597 = vmul.f32 %v1594, %v1595
    %v1598 = vperm.slane %v153, 1
    %v1599 = vadd.f32 %v1596, %v1598
    %v1600 = vadd.f32 %v1597, %v1598
    %1601 = vst.msk [vmem:[#allocation13] sm:$0xff] %vm232, %v1599
    %1602 = vst.msk [vmem:[#allocation13 + $0x8] sm:$0xff] %vm232, %v1600
    %1604 = vrot.lane.b32.xlu0 %v1404, 116
    %v1605 = vpop.permute.xlu0 %1604
    %vm1607 = vcmask 97280
    %1608 = vst.msk [vmem:[#allocation14] sm:$0xff] %vm1607, %v1403
    %1609 = vst.msk [vmem:[#allocation14 + $0x8] sm:$0xff] %vm1607, %v1605
    // Predicated region
    $region82: #{tpu_custom_call.1} parent=1 // pred_check
      _
    $region83: #{tpu_custom_call.1} parent=1 // pred_check_branch
      %1611 = sbr.rel (0) target = $region85
    $region84: #{tpu_custom_call.1} parent=1 // pred_region
      %1613 = vsyncadd [#allocation4], 0
      %s1614 = sshll.u32 [#allocation13], 4
      %s1615 = int_to_ptr.vmem [resolvable:$true] %s1614
      %s1616 = sshll.u32 %s14, 4
      %s1617 = int_to_ptr.hbm [resolvable:$true] %s1616
      %1622 = dma.vmem_to_hbm [thread:$0]  %s1615, 256, %s1617, [#allocation4], 128, 128, 8
    $region85: #{tpu_custom_call.1} parent=1 // pred_fallthru
      _
    // Predicated region
    $region86: #{tpu_custom_call.1} parent=1 // pred_check
      _
    $region87: #{tpu_custom_call.1} parent=1 // pred_check_branch
      %1624 = sbr.rel (0) target = $region89
    $region88: #{tpu_custom_call.1} parent=1 // pred_region
      %1626 = vsyncadd [#allocation15], 0
      %s1627 = sshll.u32 [#allocation14], 4
      %s1628 = int_to_ptr.vmem [resolvable:$true] %s1627
      %s1629 = sshll.u32 %s15, 4
      %s1630 = int_to_ptr.hbm [resolvable:$true] %s1629
      %1635 = dma.vmem_to_hbm [thread:$0]  %s1628, 256, %s1630, [#allocation15], 128, 128, 8
    $region89: #{tpu_custom_call.1} parent=1 // pred_fallthru
      _
    // Predicated region
    $region90: #{tpu_custom_call.1} parent=1 // pred_check
      _
    $region91: #{tpu_custom_call.1} parent=1 // pred_check_branch
      %1637 = sbr.rel (0) target = $region93
    $region92: #{tpu_custom_call.1} parent=1 // pred_region
      %1639 = dma.done [#allocation4], 256
    $region93: #{tpu_custom_call.1} parent=1 // pred_fallthru
      _
    // Predicated region
    $region94: #{tpu_custom_call.1} parent=1 // pred_check
      _
    $region95: #{tpu_custom_call.1} parent=1 // pred_check_branch
      %1641 = sbr.rel (0) target = $region97
    $region96: #{tpu_custom_call.1} parent=1 // pred_region
      %1643 = dma.done [#allocation15], 256
    $region97: #{tpu_custom_call.1} parent=1 // pred_fallthru
      _
    %1644 = vsyncpa [#allocation3], 1
    %1645 = vsyncpa [#allocation6], 1
    %1646 = vsyncpa [#allocation9], 1
    %1647 = vsyncpa [#allocation12], 1
    %1648 = vsyncpa [#allocation4], 1
    %1649 = vsyncpa [#allocation15], 1

</llo_original>
